<compile_context>
chip_gen: v6e
topology: v6e:2x2x1
jax: 0.10.0
libtpu: 0.0.40
codegen_flags: <defaults>
</compile_context>

<pallas_src>
import math
import functools

import jax
import jax.numpy as jnp
from jax.experimental import pallas as pl
from jax.experimental.pallas import tpu as pltpu


# ---------------------------------------------------------------------------
# Kernel: one grid step == (batch element, query tile).  The whole encoder
# layer runs in-kernel on that query tile (attention sees the full sequence
# of keys/values for the batch element).
# ---------------------------------------------------------------------------
def _encoder_layer_kernel(
    xq_ref, xkv_ref,
    wq_ref, bq_ref,
    wk_ref, bk_ref,
    wv_ref, bv_ref,
    wo_ref, bo_ref,
    g1_ref, beta1_ref,
    w1_ref, b1_ref,
    w2_ref, b2_ref,
    g2_ref, beta2_ref,
    y_ref,
    *, n_heads, d_k, d_v, eps,
):
    f32 = jnp.float32
    bf16 = jnp.bfloat16

    x_q = xq_ref[0]       # (tq, D) f32 : query / residual rows of this grid step
    x_kv = xkv_ref[0]     # (S,  D) f32 : full sequence for keys / values

    tq, D = x_q.shape
    S = x_kv.shape[0]
    H = n_heads

    def layer_norm(z, g_ref, b_ref):
        mean = jnp.mean(z, axis=-1, keepdims=True)
        var = jnp.mean((z - mean) ** 2, axis=-1, keepdims=True)
        return (z - mean) * jax.lax.rsqrt(var + eps) * g_ref[...] + b_ref[...]

    # bf16 activations feed the MXU; accumulation stays f32 (preferred_element_type).
    xq_b = jnp.broadcast_to(x_q.astype(bf16)[None], (H, tq, D))    # (H, tq, D)
    xkv_b = jnp.broadcast_to(x_kv.astype(bf16)[None], (H, S, D))   # (H, S,  D)

    # ---- Head-batched Q/K/V projections (contract over full D) ----------
    # Weights are head-major: (H, d_head, D); biases (H, 1, d_head) f32.
    q3 = jnp.einsum("hqd,hkd->hqk", xq_b, wq_ref[...],
                    preferred_element_type=f32) + bq_ref[...]      # (H, tq, dk)
    k3 = jnp.einsum("hsd,hkd->hsk", xkv_b, wk_ref[...],
                    preferred_element_type=f32) + bk_ref[...]      # (H, S, dk)
    v3 = jnp.einsum("hsd,hvd->hsv", xkv_b, wv_ref[...],
                    preferred_element_type=f32) + bv_ref[...]      # (H, S, dv)

    # ---- Scaled dot-product attention (softmax in f32) ------------------
    # TODO(synk): for long sequences, tile KV with an online-softmax (flash) grid
    #             axis instead of materializing the (H, tq, S) score block.
    # TODO(synk): optional attention mask (mask=None path only).
    scale = 1.0 / math.sqrt(d_k)
    s = jnp.einsum("hqk,hsk->hqs", q3.astype(bf16), k3.astype(bf16),
                   preferred_element_type=f32) * scale             # (H, tq, S)
    s = s - jnp.max(s, axis=-1, keepdims=True)
    p = jnp.exp(s)
    p = p * pl.reciprocal(jnp.sum(p, axis=-1, keepdims=True), approx=True)

    o3 = jnp.einsum("hqs,hsv->hqv", p.astype(bf16), v3.astype(bf16),
                    preferred_element_type=f32)                    # (H, tq, dv)

    # ---- Output projection: head-batched dot + reduce over heads --------
    attn = jnp.einsum("hqv,hvd->hqd", o3.astype(bf16), wo_ref[...],
                      preferred_element_type=f32)                  # (H, tq, D)
    attn = jnp.sum(attn, axis=0) + bo_ref[...]                     # (tq, D)

    # ---- Add & Norm 1 (dropout == identity at inference) ----------------
    x1 = layer_norm(x_q + attn, g1_ref, beta1_ref)

    # ---- FFN (ReLU), bf16 matmuls / f32 accumulation ---------------------
    h1 = jnp.dot(x1.astype(bf16), w1_ref[...],
                 preferred_element_type=f32) + b1_ref[...]         # (tq, d_ff)
    h1 = jnp.maximum(h1, 0.0)
    ff = jnp.dot(h1.astype(bf16), w2_ref[...],
                 preferred_element_type=f32) + b2_ref[...]         # (tq, D)

    # ---- Add & Norm 2 ----------------------------------------------------
    y_ref[0] = layer_norm(x1 + ff, g2_ref, beta2_ref)


# ---------------------------------------------------------------------------
# Wrapper
# ---------------------------------------------------------------------------
def encoder_layer(x, params, *, n_heads, d_k, d_v, eps=1e-5):
    B, S, D = x.shape
    d_ff = params["w1"].shape[1]
    f32, bf16 = jnp.float32, jnp.bfloat16

    # Query-tile size: lane/sublane friendly for long sequences, full S for toys.
    tq = S
    for t in (256, 128):
        if S % t == 0:
            tq = t
            break
    n_qt = S // tq

    # --- Head-major bf16 weight layouts (plain-JAX layout plumbing, done once) ---
    def head_major(w, d_head):           # (D_in, H*d_head) -> (H, d_head, D_in)
        d_in = w.shape[0]
        return jnp.transpose(w.reshape(d_in, n_heads, d_head), (1, 2, 0)).astype(bf16)

    def head_bias(b, d_head):            # (1, H*d_head) -> (H, 1, d_head)
        return b.reshape(n_heads, d_head)[:, None, :].astype(f32)

    param_arrays = [
        head_major(params["wq"], d_k), head_bias(params["bq"], d_k),
        head_major(params["wk"], d_k), head_bias(params["bk"], d_k),
        head_major(params["wv"], d_v), head_bias(params["bv"], d_v),
        params["wo"].reshape(n_heads, d_v, D).astype(bf16), params["bo"].astype(f32),
        params["g1"].astype(f32), params["beta1"].astype(f32),
        params["w1"].astype(bf16), params["b1"].astype(f32),
        params["w2"].astype(bf16), params["b2"].astype(f32),
        params["g2"].astype(f32), params["beta2"].astype(f32),
    ]

    # Constant-index full-array specs: weight blocks stay VMEM-resident across the grid.
    # (For very large models on v7x, single-buffer these with pipeline_mode=pl.Buffered(1)
    #  and/or tile the FFN weights over d_ff.)
    def full_spec(a):
        nd = a.ndim
        return pl.BlockSpec(a.shape, lambda b, qi, _nd=nd: (0,) * _nd)

    in_specs = [
        pl.BlockSpec((1, tq, D), lambda b, qi: (b, qi, 0)),   # query / residual rows
        pl.BlockSpec((1, S, D), lambda b, qi: (b, 0, 0)),     # full sequence for K/V
    ] + [full_spec(a) for a in param_arrays]
    out_spec = pl.BlockSpec((1, tq, D), lambda b, qi: (b, qi, 0))

    # Explicit VMEM budget: double-buffered blocks + resident weights + activation headroom.
    def nbytes(a):
        return a.size * a.dtype.itemsize
    weight_bytes = 2 * sum(nbytes(a) for a in param_arrays)
    block_bytes = 2 * 4 * (2 * tq * D + S * D)
    act_bytes = 16 * (3 * n_heads * S * max(d_k, d_v) + n_heads * tq * S
                      + 4 * tq * D + tq * d_ff)
    vmem_limit = int(1.5 * (weight_bytes + block_bytes + act_bytes))
    vmem_limit = max(16 * 1024 * 1024, min(vmem_limit, 64 * 1024 * 1024))

    kernel = functools.partial(
        _encoder_layer_kernel, n_heads=n_heads, d_k=d_k, d_v=d_v, eps=eps
    )

    return pl.pallas_call(
        kernel,
        out_shape=jax.ShapeDtypeStruct((B, S, D), jnp.float32),
        grid_spec=pltpu.PrefetchScalarGridSpec(
            num_scalar_prefetch=0,
            grid=(B, n_qt),
            in_specs=in_specs,
            out_specs=out_spec,
        ),
        compiler_params=pltpu.CompilerParams(
            dimension_semantics=("parallel", "parallel"),
            vmem_limit_bytes=vmem_limit,
        ),
    )(x, x, *param_arrays)


# ---------------------------------------------------------------------------
# Pure-JAX f32 reference (for correctness check)
# ---------------------------------------------------------------------------
def encoder_layer_ref(x, p, *, n_heads, d_k, d_v, eps=1e-5):
    def ln(z, g, b):
        m = jnp.mean(z, -1, keepdims=True)
        v = jnp.mean((z - m) ** 2, -1, keepdims=True)
        return (z - m) / jnp.sqrt(v + eps) * g + b

    B, S, D = x.shape
    q = x @ p["wq"] + p["bq"]
    k = x @ p["wk"] + p["bk"]
    v = x @ p["wv"] + p["bv"]
    q = q.reshape(B, S, n_heads, d_k).transpose(0, 2, 1, 3)
    k = k.reshape(B, S, n_heads, d_k).transpose(0, 2, 1, 3)
    v = v.reshape(B, S, n_heads, d_v).transpose(0, 2, 1, 3)
    s = jnp.einsum("bhqd,bhkd->bhqk", q, k) / math.sqrt(d_k)
    pmat = jax.nn.softmax(s, axis=-1)
    o = jnp.einsum("bhqk,bhkd->bhqd", pmat, v).transpose(0, 2, 1, 3).reshape(B, S, -1)
    attn = o @ p["wo"] + p["bo"]
    x1 = ln(x + attn, p["g1"], p["beta1"])
    ff = jnp.maximum(x1 @ p["w1"] + p["b1"], 0.0) @ p["w2"] + p["b2"]
    return ln(x1 + ff, p["g2"], p["beta2"])


# ---------------------------------------------------------------------------
# Deterministic parameter init + smoke test
# ---------------------------------------------------------------------------
def init_params(key, d_model, d_k, d_v, n_heads, d_ff):
    ks = jax.random.split(key, 8)

    def lin(k, fan_in, fan_out):
        bound = 1.0 / math.sqrt(fan_in)
        kw, kb = jax.random.split(k)
        w = jax.random.uniform(kw, (fan_in, fan_out), jnp.float32, -bound, bound)
        b = jax.random.uniform(kb, (1, fan_out), jnp.float32, -bound, bound)
        return w, b

    wq, bq = lin(ks[0], d_model, n_heads * d_k)
    wk, bk = lin(ks[1], d_model, n_heads * d_k)
    wv, bv = lin(ks[2], d_model, n_heads * d_v)
    wo, bo = lin(ks[3], n_heads * d_v, d_model)
    w1, b1 = lin(ks[4], d_model, d_ff)
    w2, b2 = lin(ks[5], d_ff, d_model)
    return dict(
        wq=wq, bq=bq, wk=wk, bk=bk, wv=wv, bv=bv, wo=wo, bo=bo,
        g1=jnp.ones((1, d_model), jnp.float32), beta1=jnp.zeros((1, d_model), jnp.float32),
        w1=w1, b1=b1, w2=w2, b2=b2,
        g2=jnp.ones((1, d_model), jnp.float32), beta2=jnp.zeros((1, d_model), jnp.float32),
    )


if __name__ == "__main__":
    # Small shapes consistent with the module's forward.
    # NOTE: d_model=32 / d_k=8 are toy values; production shapes should use
    # feature dims that are multiples of 128 for lane-dense stores / MXU use.
    batch, seq_len, d_model = 2, 8, 32
    d_k = d_v = 8
    n_heads = 4
    d_ff = 64

    key = jax.random.PRNGKey(0)
    kx, kp = jax.random.split(key)
    x = jax.random.normal(kx, (batch, seq_len, d_model), jnp.float32)
    params = init_params(kp, d_model, d_k, d_v, n_heads, d_ff)

    y = encoder_layer(x, params, n_heads=n_heads, d_k=d_k, d_v=d_v)
    y = jax.block_until_ready(y)

    y_ref = encoder_layer_ref(x, params, n_heads=n_heads, d_k=d_k, d_v=d_v)
    assert y.shape == (batch, seq_len, d_model)
    max_err = float(jnp.max(jnp.abs(y - y_ref)))
    # bf16 matmul inputs (f32 accumulation) + approx reciprocal -> looser tolerance than pure f32.
    assert jnp.allclose(y, y_ref, atol=5e-2, rtol=5e-2), (
        f"mismatch vs JAX reference (max abs err {max_err})"
    )
    print("KERNEL_OK")
</pallas_src>

<mosaic_0001>
module attributes {stable_mosaic.version = 11 : i64} {
  func.func @_encoder_layer_kernel(%arg0: i32, %arg1: i32, %arg2: memref<1x8x32xf32, #tpu.memory_space<vmem>>, %arg3: memref<1x8x32xf32, #tpu.memory_space<vmem>>, %arg4: memref<4x8x32xbf16, #tpu.memory_space<vmem>>, %arg5: memref<4x1x8xf32, #tpu.memory_space<vmem>>, %arg6: memref<4x8x32xbf16, #tpu.memory_space<vmem>>, %arg7: memref<4x1x8xf32, #tpu.memory_space<vmem>>, %arg8: memref<4x8x32xbf16, #tpu.memory_space<vmem>>, %arg9: memref<4x1x8xf32, #tpu.memory_space<vmem>>, %arg10: memref<4x8x32xbf16, #tpu.memory_space<vmem>>, %arg11: memref<1x32xf32, #tpu.memory_space<vmem>>, %arg12: memref<1x32xf32, #tpu.memory_space<vmem>>, %arg13: memref<1x32xf32, #tpu.memory_space<vmem>>, %arg14: memref<32x64xbf16, #tpu.memory_space<vmem>>, %arg15: memref<1x64xf32, #tpu.memory_space<vmem>>, %arg16: memref<64x32xbf16, #tpu.memory_space<vmem>>, %arg17: memref<1x32xf32, #tpu.memory_space<vmem>>, %arg18: memref<1x32xf32, #tpu.memory_space<vmem>>, %arg19: memref<1x32xf32, #tpu.memory_space<vmem>>, %arg20: memref<1x8x32xf32, #tpu.memory_space<vmem>>) attributes {dimension_semantics = [#tpu.dimension_semantics<parallel>, #tpu.dimension_semantics<parallel>], iteration_bounds = array<i64: 2, 1>, scalar_prefetch = 0 : i64, scratch_operands = 0 : i64, tpu.core_type = #tpu.core_type<tc>, window_params = [{transform_indices = @transform_0, window_bounds = array<i64: 1, 8, 32>}, {transform_indices = @transform_1, window_bounds = array<i64: 1, 8, 32>}, {pipeline_mode = #tpu.pipeline_mode<synchronous>, transform_indices = @transform_2, window_bounds = array<i64: 4, 8, 32>}, {pipeline_mode = #tpu.pipeline_mode<synchronous>, transform_indices = @transform_3, window_bounds = array<i64: 4, 1, 8>}, {pipeline_mode = #tpu.pipeline_mode<synchronous>, transform_indices = @transform_4, window_bounds = array<i64: 4, 8, 32>}, {pipeline_mode = #tpu.pipeline_mode<synchronous>, transform_indices = @transform_5, window_bounds = array<i64: 4, 1, 8>}, {pipeline_mode = #tpu.pipeline_mode<synchronous>, transform_indices = @transform_6, window_bounds = array<i64: 4, 8, 32>}, {pipeline_mode = #tpu.pipeline_mode<synchronous>, transform_indices = @transform_7, window_bounds = array<i64: 4, 1, 8>}, {pipeline_mode = #tpu.pipeline_mode<synchronous>, transform_indices = @transform_8, window_bounds = array<i64: 4, 8, 32>}, {pipeline_mode = #tpu.pipeline_mode<synchronous>, transform_indices = @transform_9, window_bounds = array<i64: 1, 32>}, {pipeline_mode = #tpu.pipeline_mode<synchronous>, transform_indices = @transform_10, window_bounds = array<i64: 1, 32>}, {pipeline_mode = #tpu.pipeline_mode<synchronous>, transform_indices = @transform_11, window_bounds = array<i64: 1, 32>}, {pipeline_mode = #tpu.pipeline_mode<synchronous>, transform_indices = @transform_12, window_bounds = array<i64: 32, 64>}, {pipeline_mode = #tpu.pipeline_mode<synchronous>, transform_indices = @transform_13, window_bounds = array<i64: 1, 64>}, {pipeline_mode = #tpu.pipeline_mode<synchronous>, transform_indices = @transform_14, window_bounds = array<i64: 64, 32>}, {pipeline_mode = #tpu.pipeline_mode<synchronous>, transform_indices = @transform_15, window_bounds = array<i64: 1, 32>}, {pipeline_mode = #tpu.pipeline_mode<synchronous>, transform_indices = @transform_16, window_bounds = array<i64: 1, 32>}, {pipeline_mode = #tpu.pipeline_mode<synchronous>, transform_indices = @transform_17, window_bounds = array<i64: 1, 32>}, {transform_indices = @transform_18, window_bounds = array<i64: 1, 8, 32>}]} {
    %c0 = arith.constant 0 : index
    %c0_0 = arith.constant 0 : index
    %c0_1 = arith.constant 0 : index
    %0 = vector.load %arg2[%c0, %c0_0, %c0_1] : memref<1x8x32xf32, #tpu.memory_space<vmem>>, vector<1x8x32xf32>
    %1 = vector.shape_cast %0 : vector<1x8x32xf32> to vector<8x32xf32>
    %c0_2 = arith.constant 0 : index
    %c0_3 = arith.constant 0 : index
    %c0_4 = arith.constant 0 : index
    %2 = vector.load %arg3[%c0_2, %c0_3, %c0_4] : memref<1x8x32xf32, #tpu.memory_space<vmem>>, vector<1x8x32xf32>
    %3 = vector.shape_cast %2 : vector<1x8x32xf32> to vector<8x32xf32>
    %4 = arith.truncf %1 : vector<8x32xf32> to vector<8x32xbf16>
    %5 = vector.shape_cast %4 : vector<8x32xbf16> to vector<1x8x32xbf16>
    %6 = vector.shape_cast %5 : vector<1x8x32xbf16> to vector<1x8x32xbf16>
    %7 = vector.broadcast %6 : vector<1x8x32xbf16> to vector<4x8x32xbf16>
    %8 = arith.truncf %3 : vector<8x32xf32> to vector<8x32xbf16>
    %9 = vector.shape_cast %8 : vector<8x32xbf16> to vector<1x8x32xbf16>
    %10 = vector.shape_cast %9 : vector<1x8x32xbf16> to vector<1x8x32xbf16>
    %11 = vector.broadcast %10 : vector<1x8x32xbf16> to vector<4x8x32xbf16>
    %c0_5 = arith.constant 0 : index
    %c0_6 = arith.constant 0 : index
    %c0_7 = arith.constant 0 : index
    %12 = vector.load %arg4[%c0_5, %c0_6, %c0_7] : memref<4x8x32xbf16, #tpu.memory_space<vmem>>, vector<4x8x32xbf16>
    "tpu.trace_start"() <{level = 10 : i32, message = "hqd,hkd->hqk"}> : () -> ()
    %cst = arith.constant dense<0.000000e+00> : vector<4x8x8xf32>
    %13 = tpu.matmul %7, %12, %cst {dimension_numbers = #tpu.dot_dimension_numbers<[2], [2], [1], [1], [0, 0, 0, 1, 1, 1], [0], [0]>} : vector<4x8x32xbf16>, vector<4x8x32xbf16>, vector<4x8x8xf32> -> vector<4x8x8xf32>
    "tpu.trace_stop"() : () -> ()
    %c0_8 = arith.constant 0 : index
    %c0_9 = arith.constant 0 : index
    %c0_10 = arith.constant 0 : index
    %14 = vector.load %arg5[%c0_8, %c0_9, %c0_10] : memref<4x1x8xf32, #tpu.memory_space<vmem>>, vector<4x1x8xf32>
    %15 = vector.broadcast %14 : vector<4x1x8xf32> to vector<4x8x8xf32>
    %16 = arith.addf %13, %15 : vector<4x8x8xf32>
    %c0_11 = arith.constant 0 : index
    %c0_12 = arith.constant 0 : index
    %c0_13 = arith.constant 0 : index
    %17 = vector.load %arg6[%c0_11, %c0_12, %c0_13] : memref<4x8x32xbf16, #tpu.memory_space<vmem>>, vector<4x8x32xbf16>
    "tpu.trace_start"() <{level = 10 : i32, message = "hsd,hkd->hsk"}> : () -> ()
    %cst_14 = arith.constant dense<0.000000e+00> : vector<4x8x8xf32>
    %18 = tpu.matmul %11, %17, %cst_14 {dimension_numbers = #tpu.dot_dimension_numbers<[2], [2], [1], [1], [0, 0, 0, 1, 1, 1], [0], [0]>} : vector<4x8x32xbf16>, vector<4x8x32xbf16>, vector<4x8x8xf32> -> vector<4x8x8xf32>
    "tpu.trace_stop"() : () -> ()
    %c0_15 = arith.constant 0 : index
    %c0_16 = arith.constant 0 : index
    %c0_17 = arith.constant 0 : index
    %19 = vector.load %arg7[%c0_15, %c0_16, %c0_17] : memref<4x1x8xf32, #tpu.memory_space<vmem>>, vector<4x1x8xf32>
    %20 = vector.broadcast %19 : vector<4x1x8xf32> to vector<4x8x8xf32>
    %21 = arith.addf %18, %20 : vector<4x8x8xf32>
    %c0_18 = arith.constant 0 : index
    %c0_19 = arith.constant 0 : index
    %c0_20 = arith.constant 0 : index
    %22 = vector.load %arg8[%c0_18, %c0_19, %c0_20] : memref<4x8x32xbf16, #tpu.memory_space<vmem>>, vector<4x8x32xbf16>
    "tpu.trace_start"() <{level = 10 : i32, message = "hsd,hvd->hsv"}> : () -> ()
    %cst_21 = arith.constant dense<0.000000e+00> : vector<4x8x8xf32>
    %23 = tpu.matmul %11, %22, %cst_21 {dimension_numbers = #tpu.dot_dimension_numbers<[2], [2], [1], [1], [0, 0, 0, 1, 1, 1], [0], [0]>} : vector<4x8x32xbf16>, vector<4x8x32xbf16>, vector<4x8x8xf32> -> vector<4x8x8xf32>
    "tpu.trace_stop"() : () -> ()
    %c0_22 = arith.constant 0 : index
    %c0_23 = arith.constant 0 : index
    %c0_24 = arith.constant 0 : index
    %24 = vector.load %arg9[%c0_22, %c0_23, %c0_24] : memref<4x1x8xf32, #tpu.memory_space<vmem>>, vector<4x1x8xf32>
    %25 = vector.broadcast %24 : vector<4x1x8xf32> to vector<4x8x8xf32>
    %26 = arith.addf %23, %25 : vector<4x8x8xf32>
    %27 = arith.truncf %16 : vector<4x8x8xf32> to vector<4x8x8xbf16>
    %28 = arith.truncf %21 : vector<4x8x8xf32> to vector<4x8x8xbf16>
    "tpu.trace_start"() <{level = 10 : i32, message = "hqk,hsk->hqs"}> : () -> ()
    %cst_25 = arith.constant dense<0.000000e+00> : vector<4x8x8xf32>
    %29 = tpu.matmul %27, %28, %cst_25 {dimension_numbers = #tpu.dot_dimension_numbers<[2], [2], [1], [1], [0, 0, 0, 1, 1, 1], [0], [0]>} : vector<4x8x8xbf16>, vector<4x8x8xbf16>, vector<4x8x8xf32> -> vector<4x8x8xf32>
    "tpu.trace_stop"() : () -> ()
    %cst_26 = arith.constant 0.353553385 : f32
    %30 = vector.broadcast %cst_26 : f32 to vector<4x8x8xf32>
    %31 = arith.mulf %29, %30 : vector<4x8x8xf32>
    %cst_27 = arith.constant dense<0xFF800000> : vector<4x8xf32>
    %32 = vector.multi_reduction <maximumf>, %31, %cst_27 [2] : vector<4x8x8xf32> to vector<4x8xf32>
    %33 = vector.shape_cast %32 : vector<4x8xf32> to vector<4x8x1xf32>
    %34 = vector.broadcast %33 : vector<4x8x1xf32> to vector<4x8x8xf32>
    %35 = arith.subf %31, %34 : vector<4x8x8xf32>
    %36 = math.exp %35 : vector<4x8x8xf32>
    %cst_28 = arith.constant dense<0.000000e+00> : vector<4x8xf32>
    %37 = vector.multi_reduction <add>, %36, %cst_28 [2] : vector<4x8x8xf32> to vector<4x8xf32>
    %38 = vector.shape_cast %37 : vector<4x8xf32> to vector<4x8x1xf32>
    %39 = tpu.reciprocal %38 {approx = true} : vector<4x8x1xf32> -> vector<4x8x1xf32>
    %40 = vector.broadcast %39 : vector<4x8x1xf32> to vector<4x8x8xf32>
    %41 = arith.mulf %36, %40 : vector<4x8x8xf32>
    %42 = arith.truncf %41 : vector<4x8x8xf32> to vector<4x8x8xbf16>
    %43 = arith.truncf %26 : vector<4x8x8xf32> to vector<4x8x8xbf16>
    "tpu.trace_start"() <{level = 10 : i32, message = "hqs,hsv->hqv"}> : () -> ()
    %cst_29 = arith.constant dense<0.000000e+00> : vector<4x8x8xf32>
    %44 = tpu.matmul %42, %43, %cst_29 {dimension_numbers = #tpu.dot_dimension_numbers<[2], [1], [1], [2], [0, 0, 0, 1, 1, 2], [0], [0]>} : vector<4x8x8xbf16>, vector<4x8x8xbf16>, vector<4x8x8xf32> -> vector<4x8x8xf32>
    "tpu.trace_stop"() : () -> ()
    %45 = arith.truncf %44 : vector<4x8x8xf32> to vector<4x8x8xbf16>
    %c0_30 = arith.constant 0 : index
    %c0_31 = arith.constant 0 : index
    %c0_32 = arith.constant 0 : index
    %46 = vector.load %arg10[%c0_30, %c0_31, %c0_32] : memref<4x8x32xbf16, #tpu.memory_space<vmem>>, vector<4x8x32xbf16>
    "tpu.trace_start"() <{level = 10 : i32, message = "hqv,hvd->hqd"}> : () -> ()
    %cst_33 = arith.constant dense<0.000000e+00> : vector<4x8x32xf32>
    %47 = tpu.matmul %45, %46, %cst_33 {dimension_numbers = #tpu.dot_dimension_numbers<[2], [1], [1], [2], [0, 0, 0, 1, 1, 2], [0], [0]>} : vector<4x8x8xbf16>, vector<4x8x32xbf16>, vector<4x8x32xf32> -> vector<4x8x32xf32>
    "tpu.trace_stop"() : () -> ()
    %cst_34 = arith.constant dense<0.000000e+00> : vector<8x32xf32>
    %48 = vector.multi_reduction <add>, %47, %cst_34 [0] : vector<4x8x32xf32> to vector<8x32xf32>
    %c0_35 = arith.constant 0 : index
    %c0_36 = arith.constant 0 : index
    %49 = vector.load %arg11[%c0_35, %c0_36] : memref<1x32xf32, #tpu.memory_space<vmem>>, vector<1x32xf32>
    %50 = vector.broadcast %49 : vector<1x32xf32> to vector<8x32xf32>
    %51 = arith.addf %48, %50 : vector<8x32xf32>
    %52 = arith.addf %1, %51 : vector<8x32xf32>
    %cst_37 = arith.constant dense<0.000000e+00> : vector<8xf32>
    %53 = vector.multi_reduction <add>, %52, %cst_37 [1] : vector<8x32xf32> to vector<8xf32>
    %54 = vector.shape_cast %53 : vector<8xf32> to vector<8x1xf32>
    %cst_38 = arith.constant 3.200000e+01 : f32
    %55 = vector.broadcast %cst_38 : f32 to vector<8x1xf32>
    %56 = arith.divf %54, %55 : vector<8x1xf32>
    %57 = vector.broadcast %56 : vector<8x1xf32> to vector<8x32xf32>
    %58 = arith.subf %52, %57 : vector<8x32xf32>
    %59 = arith.mulf %58, %58 : vector<8x32xf32>
    %cst_39 = arith.constant dense<0.000000e+00> : vector<8xf32>
    %60 = vector.multi_reduction <add>, %59, %cst_39 [1] : vector<8x32xf32> to vector<8xf32>
    %61 = vector.shape_cast %60 : vector<8xf32> to vector<8x1xf32>
    %cst_40 = arith.constant 3.200000e+01 : f32
    %62 = vector.broadcast %cst_40 : f32 to vector<8x1xf32>
    %63 = arith.divf %61, %62 : vector<8x1xf32>
    %64 = vector.broadcast %56 : vector<8x1xf32> to vector<8x32xf32>
    %65 = arith.subf %52, %64 : vector<8x32xf32>
    %cst_41 = arith.constant 9.99999974E-6 : f32
    %66 = vector.broadcast %cst_41 : f32 to vector<8x1xf32>
    %67 = arith.addf %63, %66 : vector<8x1xf32>
    %68 = math.rsqrt %67 : vector<8x1xf32>
    %69 = vector.broadcast %68 : vector<8x1xf32> to vector<8x32xf32>
    %70 = arith.mulf %65, %69 : vector<8x32xf32>
    %c0_42 = arith.constant 0 : index
    %c0_43 = arith.constant 0 : index
    %71 = vector.load %arg12[%c0_42, %c0_43] : memref<1x32xf32, #tpu.memory_space<vmem>>, vector<1x32xf32>
    %72 = vector.broadcast %71 : vector<1x32xf32> to vector<8x32xf32>
    %73 = arith.mulf %70, %72 : vector<8x32xf32>
    %c0_44 = arith.constant 0 : index
    %c0_45 = arith.constant 0 : index
    %74 = vector.load %arg13[%c0_44, %c0_45] : memref<1x32xf32, #tpu.memory_space<vmem>>, vector<1x32xf32>
    %75 = vector.broadcast %74 : vector<1x32xf32> to vector<8x32xf32>
    %76 = arith.addf %73, %75 : vector<8x32xf32>
    %77 = arith.truncf %76 : vector<8x32xf32> to vector<8x32xbf16>
    %c0_46 = arith.constant 0 : index
    %c0_47 = arith.constant 0 : index
    %78 = vector.load %arg14[%c0_46, %c0_47] : memref<32x64xbf16, #tpu.memory_space<vmem>>, vector<32x64xbf16>
    %cst_48 = arith.constant dense<0.000000e+00> : vector<8x64xf32>
    %79 = tpu.matmul %77, %78, %cst_48 {dimension_numbers = #tpu.dot_dimension_numbers<[1], [0], [0], [1], [0, 0, 1, 1], [], []>} : vector<8x32xbf16>, vector<32x64xbf16>, vector<8x64xf32> -> vector<8x64xf32>
    %c0_49 = arith.constant 0 : index
    %c0_50 = arith.constant 0 : index
    %80 = vector.load %arg15[%c0_49, %c0_50] : memref<1x64xf32, #tpu.memory_space<vmem>>, vector<1x64xf32>
    %81 = vector.broadcast %80 : vector<1x64xf32> to vector<8x64xf32>
    %82 = arith.addf %79, %81 : vector<8x64xf32>
    %cst_51 = arith.constant 0.000000e+00 : f32
    %83 = vector.broadcast %cst_51 : f32 to vector<8x64xf32>
    %84 = arith.maximumf %82, %83 : vector<8x64xf32>
    %85 = arith.truncf %84 : vector<8x64xf32> to vector<8x64xbf16>
    %c0_52 = arith.constant 0 : index
    %c0_53 = arith.constant 0 : index
    %86 = vector.load %arg16[%c0_52, %c0_53] : memref<64x32xbf16, #tpu.memory_space<vmem>>, vector<64x32xbf16>
    %cst_54 = arith.constant dense<0.000000e+00> : vector<8x32xf32>
    %87 = tpu.matmul %85, %86, %cst_54 {dimension_numbers = #tpu.dot_dimension_numbers<[1], [0], [0], [1], [0, 0, 1, 1], [], []>} : vector<8x64xbf16>, vector<64x32xbf16>, vector<8x32xf32> -> vector<8x32xf32>
    %c0_55 = arith.constant 0 : index
    %c0_56 = arith.constant 0 : index
    %88 = vector.load %arg17[%c0_55, %c0_56] : memref<1x32xf32, #tpu.memory_space<vmem>>, vector<1x32xf32>
    %89 = vector.broadcast %88 : vector<1x32xf32> to vector<8x32xf32>
    %90 = arith.addf %87, %89 : vector<8x32xf32>
    %91 = arith.addf %76, %90 : vector<8x32xf32>
    %cst_57 = arith.constant dense<0.000000e+00> : vector<8xf32>
    %92 = vector.multi_reduction <add>, %91, %cst_57 [1] : vector<8x32xf32> to vector<8xf32>
    %93 = vector.shape_cast %92 : vector<8xf32> to vector<8x1xf32>
    %cst_58 = arith.constant 3.200000e+01 : f32
    %94 = vector.broadcast %cst_58 : f32 to vector<8x1xf32>
    %95 = arith.divf %93, %94 : vector<8x1xf32>
    %96 = vector.broadcast %95 : vector<8x1xf32> to vector<8x32xf32>
    %97 = arith.subf %91, %96 : vector<8x32xf32>
    %98 = arith.mulf %97, %97 : vector<8x32xf32>
    %cst_59 = arith.constant dense<0.000000e+00> : vector<8xf32>
    %99 = vector.multi_reduction <add>, %98, %cst_59 [1] : vector<8x32xf32> to vector<8xf32>
    %100 = vector.shape_cast %99 : vector<8xf32> to vector<8x1xf32>
    %cst_60 = arith.constant 3.200000e+01 : f32
    %101 = vector.broadcast %cst_60 : f32 to vector<8x1xf32>
    %102 = arith.divf %100, %101 : vector<8x1xf32>
    %103 = vector.broadcast %95 : vector<8x1xf32> to vector<8x32xf32>
    %104 = arith.subf %91, %103 : vector<8x32xf32>
    %cst_61 = arith.constant 9.99999974E-6 : f32
    %105 = vector.broadcast %cst_61 : f32 to vector<8x1xf32>
    %106 = arith.addf %102, %105 : vector<8x1xf32>
    %107 = math.rsqrt %106 : vector<8x1xf32>
    %108 = vector.broadcast %107 : vector<8x1xf32> to vector<8x32xf32>
    %109 = arith.mulf %104, %108 : vector<8x32xf32>
    %c0_62 = arith.constant 0 : index
    %c0_63 = arith.constant 0 : index
    %110 = vector.load %arg18[%c0_62, %c0_63] : memref<1x32xf32, #tpu.memory_space<vmem>>, vector<1x32xf32>
    %111 = vector.broadcast %110 : vector<1x32xf32> to vector<8x32xf32>
    %112 = arith.mulf %109, %111 : vector<8x32xf32>
    %c0_64 = arith.constant 0 : index
    %c0_65 = arith.constant 0 : index
    %113 = vector.load %arg19[%c0_64, %c0_65] : memref<1x32xf32, #tpu.memory_space<vmem>>, vector<1x32xf32>
    %114 = vector.broadcast %113 : vector<1x32xf32> to vector<8x32xf32>
    %115 = arith.addf %112, %114 : vector<8x32xf32>
    %c0_66 = arith.constant 0 : index
    %c0_67 = arith.constant 0 : index
    %c0_68 = arith.constant 0 : index
    %116 = vector.load %arg20[%c0_66, %c0_67, %c0_68] : memref<1x8x32xf32, #tpu.memory_space<vmem>>, vector<1x8x32xf32>
    %117 = vector.shape_cast %116 : vector<1x8x32xf32> to vector<8x32xf32>
    %118 = vector.shape_cast %115 : vector<8x32xf32> to vector<1x8x32xf32>
    tpu.vector_store %arg20[%c0_66, %c0_67, %c0_68], %118 {strides = array<i32>} : memref<1x8x32xf32, #tpu.memory_space<vmem>>, vector<1x8x32xf32>,
    return
  }
  func.func @transform_0(%arg0: i32, %arg1: i32) -> (i32, i32, i32) {
    %c0_i32 = arith.constant 0 : i32
    %c0_i32_0 = arith.constant 0 : i32
    return %arg0, %arg1, %c0_i32 : i32, i32, i32
  }
  func.func @transform_1(%arg0: i32, %arg1: i32) -> (i32, i32, i32) {
    %c0_i32 = arith.constant 0 : i32
    %c0_i32_0 = arith.constant 0 : i32
    %c0_i32_1 = arith.constant 0 : i32
    return %arg0, %c0_i32, %c0_i32_0 : i32, i32, i32
  }
  func.func @transform_2(%arg0: i32, %arg1: i32) -> (i32, i32, i32) {
    %c0_i32 = arith.constant 0 : i32
    %c0_i32_0 = arith.constant 0 : i32
    %c0_i32_1 = arith.constant 0 : i32
    %c0_i32_2 = arith.constant 0 : i32
    return %c0_i32, %c0_i32_0, %c0_i32_1 : i32, i32, i32
  }
  func.func @transform_3(%arg0: i32, %arg1: i32) -> (i32, i32, i32) {
    %c0_i32 = arith.constant 0 : i32
    %c0_i32_0 = arith.constant 0 : i32
    %c0_i32_1 = arith.constant 0 : i32
    %c0_i32_2 = arith.constant 0 : i32
    return %c0_i32, %c0_i32_0, %c0_i32_1 : i32, i32, i32
  }
  func.func @transform_4(%arg0: i32, %arg1: i32) -> (i32, i32, i32) {
    %c0_i32 = arith.constant 0 : i32
    %c0_i32_0 = arith.constant 0 : i32
    %c0_i32_1 = arith.constant 0 : i32
    %c0_i32_2 = arith.constant 0 : i32
    return %c0_i32, %c0_i32_0, %c0_i32_1 : i32, i32, i32
  }
  func.func @transform_5(%arg0: i32, %arg1: i32) -> (i32, i32, i32) {
    %c0_i32 = arith.constant 0 : i32
    %c0_i32_0 = arith.constant 0 : i32
    %c0_i32_1 = arith.constant 0 : i32
    %c0_i32_2 = arith.constant 0 : i32
    return %c0_i32, %c0_i32_0, %c0_i32_1 : i32, i32, i32
  }
  func.func @transform_6(%arg0: i32, %arg1: i32) -> (i32, i32, i32) {
    %c0_i32 = arith.constant 0 : i32
    %c0_i32_0 = arith.constant 0 : i32
    %c0_i32_1 = arith.constant 0 : i32
    %c0_i32_2 = arith.constant 0 : i32
    return %c0_i32, %c0_i32_0, %c0_i32_1 : i32, i32, i32
  }
  func.func @transform_7(%arg0: i32, %arg1: i32) -> (i32, i32, i32) {
    %c0_i32 = arith.constant 0 : i32
    %c0_i32_0 = arith.constant 0 : i32
    %c0_i32_1 = arith.constant 0 : i32
    %c0_i32_2 = arith.constant 0 : i32
    return %c0_i32, %c0_i32_0, %c0_i32_1 : i32, i32, i32
  }
  func.func @transform_8(%arg0: i32, %arg1: i32) -> (i32, i32, i32) {
    %c0_i32 = arith.constant 0 : i32
    %c0_i32_0 = arith.constant 0 : i32
    %c0_i32_1 = arith.constant 0 : i32
    %c0_i32_2 = arith.constant 0 : i32
    return %c0_i32, %c0_i32_0, %c0_i32_1 : i32, i32, i32
  }
  func.func @transform_9(%arg0: i32, %arg1: i32) -> (i32, i32) {
    %c0_i32 = arith.constant 0 : i32
    %c0_i32_0 = arith.constant 0 : i32
    %c0_i32_1 = arith.constant 0 : i32
    return %c0_i32, %c0_i32_0 : i32, i32
  }
  func.func @transform_10(%arg0: i32, %arg1: i32) -> (i32, i32) {
    %c0_i32 = arith.constant 0 : i32
    %c0_i32_0 = arith.constant 0 : i32
    %c0_i32_1 = arith.constant 0 : i32
    return %c0_i32, %c0_i32_0 : i32, i32
  }
  func.func @transform_11(%arg0: i32, %arg1: i32) -> (i32, i32) {
    %c0_i32 = arith.constant 0 : i32
    %c0_i32_0 = arith.constant 0 : i32
    %c0_i32_1 = arith.constant 0 : i32
    return %c0_i32, %c0_i32_0 : i32, i32
  }
  func.func @transform_12(%arg0: i32, %arg1: i32) -> (i32, i32) {
    %c0_i32 = arith.constant 0 : i32
    %c0_i32_0 = arith.constant 0 : i32
    %c0_i32_1 = arith.constant 0 : i32
    return %c0_i32, %c0_i32_0 : i32, i32
  }
  func.func @transform_13(%arg0: i32, %arg1: i32) -> (i32, i32) {
    %c0_i32 = arith.constant 0 : i32
    %c0_i32_0 = arith.constant 0 : i32
    %c0_i32_1 = arith.constant 0 : i32
    return %c0_i32, %c0_i32_0 : i32, i32
  }
  func.func @transform_14(%arg0: i32, %arg1: i32) -> (i32, i32) {
    %c0_i32 = arith.constant 0 : i32
    %c0_i32_0 = arith.constant 0 : i32
    %c0_i32_1 = arith.constant 0 : i32
    return %c0_i32, %c0_i32_0 : i32, i32
  }
  func.func @transform_15(%arg0: i32, %arg1: i32) -> (i32, i32) {
    %c0_i32 = arith.constant 0 : i32
    %c0_i32_0 = arith.constant 0 : i32
    %c0_i32_1 = arith.constant 0 : i32
    return %c0_i32, %c0_i32_0 : i32, i32
  }
  func.func @transform_16(%arg0: i32, %arg1: i32) -> (i32, i32) {
    %c0_i32 = arith.constant 0 : i32
    %c0_i32_0 = arith.constant 0 : i32
    %c0_i32_1 = arith.constant 0 : i32
    return %c0_i32, %c0_i32_0 : i32, i32
  }
  func.func @transform_17(%arg0: i32, %arg1: i32) -> (i32, i32) {
    %c0_i32 = arith.constant 0 : i32
    %c0_i32_0 = arith.constant 0 : i32
    %c0_i32_1 = arith.constant 0 : i32
    return %c0_i32, %c0_i32_0 : i32, i32
  }
  func.func @transform_18(%arg0: i32, %arg1: i32) -> (i32, i32, i32) {
    %c0_i32 = arith.constant 0 : i32
    %c0_i32_0 = arith.constant 0 : i32
    return %arg0, %arg1, %c0_i32 : i32, i32, i32
  }
}

</mosaic_0001>

<llo_original>
// kernel: tpu_custom_call.1
$region0: #{tpu_custom_call.1}
  #allocation0 [shape = 'u32[]', space=smem, size = 0x4, offset = 0x4, fixed_abs, tag = 'smem constant byte address 0x4 - core index']
  #allocation1 [shape = 'u32[144,128]{1,0:T(1,128)}', space=vmem, size = 0x12000, scoped, tag = 'internal scratch']
  %s0 = inlined_call_operand.vmem [shape: f32[2,8,32], index: 0, kind: input, shape index: {}]
  %s1 = inlined_call_operand.vmem [shape: f32[2,8,32], index: 1, kind: input, shape index: {}]
  %s2 = inlined_call_operand.vmem [shape: bf16[4,8,32], index: 2, kind: input, shape index: {}]
  %s3 = inlined_call_operand.vmem [shape: f32[4,1,8], index: 3, kind: input, shape index: {}]
  %s4 = inlined_call_operand.hbm [shape: bf16[4,8,32], index: 4, kind: input, shape index: {}]
  %s5 = inlined_call_operand.vmem [shape: f32[4,1,8], index: 5, kind: input, shape index: {}]
  %s6 = inlined_call_operand.hbm [shape: bf16[4,8,32], index: 6, kind: input, shape index: {}]
  %s7 = inlined_call_operand.hbm [shape: f32[4,1,8], index: 7, kind: input, shape index: {}]
  %s8 = inlined_call_operand.hbm [shape: bf16[4,8,32], index: 8, kind: input, shape index: {}]
  %s9 = inlined_call_operand.vmem [shape: f32[1,32], index: 9, kind: input, shape index: {}]
  %s10 = inlined_call_operand.hbm [shape: f32[1,32], index: 10, kind: input, shape index: {}]
  %s11 = inlined_call_operand.hbm [shape: f32[1,32], index: 11, kind: input, shape index: {}]
  %s12 = inlined_call_operand.hbm [shape: bf16[32,64], index: 12, kind: input, shape index: {}]
  %s13 = inlined_call_operand.hbm [shape: f32[1,64], index: 13, kind: input, shape index: {}]
  %s14 = inlined_call_operand.vmem [shape: bf16[64,32], index: 14, kind: input, shape index: {}]
  %s15 = inlined_call_operand.vmem [shape: f32[1,32], index: 15, kind: input, shape index: {}]
  %s16 = inlined_call_operand.vmem [shape: f32[1,32], index: 16, kind: input, shape index: {}]
  %s17 = inlined_call_operand.vmem [shape: f32[1,32], index: 17, kind: input, shape index: {}]
  %s18 = inlined_call_operand.hbm [shape: f32[2,8,32], index: 18, kind: output, shape index: {}]
  %s19 = sld [smem:[#allocation0]]
  $region137: #{tpu_custom_call.1} parent=0
    _
  %s21 = ssub.s32 1, %s19
  %s22 = scalar_select 0, %s21, %s19
  $region1: #{tpu_custom_call.1} parent=0
    #allocation2 [shape = 'u8[8192]{0}', space=vmem, size = 0x2000, scoped, tag = 'input window, operand 4, single buffered']
    #allocation3 [shape = 's32[2]{0}', space=sflag, size = 0x8, scoped, tag = 'scoped memory for tpu_custom_call.1']
    #allocation4 [shape = 's32[2]{0}', space=sflag, size = 0x8, scoped, tag = 'scoped memory for tpu_custom_call.1']
    #allocation5 [shape = 'u8[8192]{0}', space=vmem, size = 0x2000, scoped, tag = 'input window, operand 6, single buffered']
    #allocation6 [shape = 's32[1]{0}', space=sflag, size = 0x4, scoped, tag = 'scoped memory for tpu_custom_call.1']
    #allocation7 [shape = 'u8[2048]{0}', space=vmem, size = 0x800, scoped, tag = 'input window, operand 7, single buffered']
    #allocation8 [shape = 'u8[8192]{0}', space=vmem, size = 0x2000, scoped, tag = 'input window, operand 8, single buffered']
    #allocation9 [shape = 's32[1]{0}', space=sflag, size = 0x4, scoped, tag = 'scoped memory for tpu_custom_call.1']
    #allocation10 [shape = 'u8[512]{0}', space=vmem, size = 0x400, scoped, tag = 'input window, operand 10, single buffered']
    #allocation11 [shape = 'u8[512]{0}', space=vmem, size = 0x400, scoped, tag = 'input window, operand 11, single buffered']
    #allocation12 [shape = 's32[1]{0}', space=sflag, size = 0x4, scoped, tag = 'scoped memory for tpu_custom_call.1']
    #allocation13 [shape = 'u8[8192]{0}', space=vmem, size = 0x2000, scoped, tag = 'input window, operand 12, single buffered']
    #allocation14 [shape = 'u8[512]{0}', space=vmem, size = 0x400, scoped, tag = 'input window, operand 13, single buffered']
    #allocation15 [shape = 's32[1]{0}', space=sflag, size = 0x4, scoped, tag = 'scoped memory for tpu_custom_call.1']
    #allocation16 [shape = 'u8[8192]{0}', space=vmem, size = 0x2000, scoped, tag = 'output window, operand 0']
    %23 = vsyncpa [#allocation3], 0
    %24 = vsyncpa [#allocation6], 0
    %25 = vsyncpa [#allocation9], 0
    %26 = vsyncpa [#allocation12], 0
    %27 = vsyncpa [#allocation15], 0
    %28 = vsyncpa [#allocation4], 0
    %s29 = scalar_lea.sflag [#allocation4], 1
    %30 = vsyncpa %s29, 0
    loop: start=0, step=1, limit=4
    $region2: #{tpu_custom_call.1} parent=1 // loop_pre_header
      _
    $region3: #{tpu_custom_call.1} parent=1 // loop_header
      %s32 = sphi 0, %s36
      %p33 = scmp.ge.s32.totalorder %s32, 4
      %s39 = sphi 0, %s51
      %s40 = sphi 0, %s47
      %s41 = sphi 0, %s39
      %s42 = sphi 0, %s40
      %s43 = sphi 0, %s41
      %s44 = sphi 0, %s42
      %s56 = sphi 0, %s58
      %s59 = sphi 0, %s56
      %s60 = sphi 0, %s59
      %s76 = sphi 0, %s60
      %s82 = sphi 0, %s84
      %s85 = sphi 0, %s82
      %s86 = sphi 0, %s85
      %s102 = sphi 0, %s86
      %s106 = sphi 0, %s106
      %s108 = sphi 0, %s106
      %s109 = sphi 0, %s108
      %s123 = sphi 0, %s109
      %s127 = sphi 0, %s127
      %s129 = sphi 0, %s127
      %s130 = sphi 0, %s129
      %s144 = sphi 0, %s130
      %s148 = sphi 0, %s148
      %s150 = sphi 0, %s148
      %s151 = sphi 0, %s150
      %s165 = sphi 0, %s151
      %s169 = sphi 0, %s169
      %s171 = sphi 0, %s169
      %s172 = sphi 0, %s171
      %s186 = sphi 0, %s172
      %s190 = sphi 0, %s190
      %s192 = sphi 0, %s190
      %s193 = sphi 0, %s192
      %s207 = sphi 0, %s193
      %s211 = sphi 0, %s211
      %s213 = sphi 0, %s211
      %s214 = sphi 0, %s213
      %s228 = sphi 0, %s214
      %s232 = sphi 0, %s232
      %s234 = sphi 0, %s232
      %s235 = sphi 0, %s234
      %s249 = sphi 0, %s235
      %s253 = sphi 0, %s253
      %s255 = sphi 0, %s253
      %s256 = sphi 0, %s255
      %s270 = sphi 0, %s256
      %s274 = sphi 0, %s274
      %s276 = sphi 0, %s274
      %s277 = sphi 0, %s276
      %s291 = sphi 0, %s277
      %s295 = sphi 0, %s295
      %s297 = sphi 0, %s295
      %s298 = sphi 0, %s297
      %s312 = sphi 0, %s298
      %s316 = sphi 0, %s316
      %s318 = sphi 0, %s316
      %s319 = sphi 0, %s318
      %s333 = sphi 0, %s319
      %s337 = sphi 0, %s337
      %s339 = sphi 0, %s337
      %s340 = sphi 0, %s339
      %s354 = sphi 0, %s340
      %s358 = sphi 0, %s358
      %s360 = sphi 0, %s358
      %s361 = sphi 0, %s360
      %s375 = sphi 0, %s361
      %s379 = sphi 0, %s379
      %s381 = sphi 0, %s379
      %s382 = sphi 0, %s381
      %s396 = sphi 0, %s382
      %s400 = sphi 0, %s400
      %s402 = sphi 0, %s400
      %s403 = sphi 0, %s402
      %s417 = sphi 0, %s403
      %s421 = sphi 0, %s421
      %s423 = sphi 0, %s421
      %s424 = sphi 0, %s423
      %s438 = sphi 0, %s424
      %s446 = sphi 0, %s448
      %s449 = sphi 0, %s446
      %s450 = sphi 0, %s449
      %s466 = sphi 0, %s450
    $region4: #{tpu_custom_call.1} parent=1 // loop_header_branch
      %35 = sbr.rel (%p33) target = $region8
    $region5: #{tpu_custom_call.1} parent=1 // loop_body
      %s37 = ssub.s32 %s32, 1
      %s38 = ssub.s32 %s32, 2
      %s45 = sadd.s32 1, %s40
      %p46 = scmp.ge.s32.totalorder %s45, 1
      %s47 = scalar_select %p46, 0, %s45
      %s48 = sadd.s32 1, %s39
      %s49 = scalar_select %p46, %s48, %s39
      %p50 = scmp.ge.s32.totalorder %s49, 2
      %s51 = scalar_select %p50, 0, %s49
      %s52 = ssub.s32 %s39, %s51
      %s53 = ssub.s32 %s40, %s47
      %s54 = sor.u32 %s52, %s53
      %p55 = scmp.eq.s32.totalorder %s54, 0
      %s57 = sadd.s32 %s56, 1
      %s58 = scalar_select %p55, %s56, %s57
      %p61 = pneg %p55
      %p62 = scmp.eq.s32.totalorder %s32, 1
      %p63 = por %p61, %p62
      %p64 = scmp.ne.s32.totalorder %s56, %s59
      %p65 = scmp.eq.s32.totalorder %s32, 0
      %p66 = por %p64, %p65
      %p67 = scmp.ne.s32.totalorder %s56, %s59
      %p68 = scmp.eq.s32.totalorder %s37, 1
      %p69 = por %p67, %p68
      %p70 = scmp.ne.s32.totalorder %s59, %s60
      %p71 = scmp.eq.s32.totalorder %s37, 0
      %p72 = por %p70, %p71
      %p73 = scmp.ne.s32.totalorder %s59, %s60
      %p74 = scmp.eq.s32.totalorder %s38, 1
      %p75 = por %p73, %p74
      %p77 = scmp.ne.s32.totalorder %s60, %s76
      %p78 = scmp.eq.s32.totalorder %s38, 0
      %p79 = por %p77, %p78
      %s80 = ssub.s32 %s39, %s51
      %p81 = scmp.eq.s32.totalorder %s80, 0
      %s83 = sadd.s32 %s82, 1
      %s84 = scalar_select %p81, %s82, %s83
      %p87 = pneg %p81
      %p88 = scmp.eq.s32.totalorder %s32, 1
      %p89 = por %p87, %p88
      %p90 = scmp.ne.s32.totalorder %s82, %s85
      %p91 = scmp.eq.s32.totalorder %s32, 0
      %p92 = por %p90, %p91
      %p93 = scmp.ne.s32.totalorder %s82, %s85
      %p94 = scmp.eq.s32.totalorder %s37, 1
      %p95 = por %p93, %p94
      %p96 = scmp.ne.s32.totalorder %s85, %s86
      %p97 = scmp.eq.s32.totalorder %s37, 0
      %p98 = por %p96, %p97
      %p99 = scmp.ne.s32.totalorder %s85, %s86
      %p100 = scmp.eq.s32.totalorder %s38, 1
      %p101 = por %p99, %p100
      %p103 = scmp.ne.s32.totalorder %s86, %s102
      %p104 = scmp.eq.s32.totalorder %s38, 0
      %p105 = por %p103, %p104
      %s107 = sadd.s32 %s106, 1
      %p110 = scmp.eq.s32.totalorder %s32, 1
      %p111 = scmp.ne.s32.totalorder %s106, %s108
      %p112 = scmp.eq.s32.totalorder %s32, 0
      %p113 = por %p111, %p112
      %p114 = scmp.ne.s32.totalorder %s106, %s108
      %p115 = scmp.eq.s32.totalorder %s37, 1
      %p116 = por %p114, %p115
      %p117 = scmp.ne.s32.totalorder %s108, %s109
      %p118 = scmp.eq.s32.totalorder %s37, 0
      %p119 = por %p117, %p118
      %p120 = scmp.ne.s32.totalorder %s108, %s109
      %p121 = scmp.eq.s32.totalorder %s38, 1
      %p122 = por %p120, %p121
      %p124 = scmp.ne.s32.totalorder %s109, %s123
      %p125 = scmp.eq.s32.totalorder %s38, 0
      %p126 = por %p124, %p125
      %s128 = sadd.s32 %s127, 1
      %p131 = scmp.eq.s32.totalorder %s32, 1
      %p132 = scmp.ne.s32.totalorder %s127, %s129
      %p133 = scmp.eq.s32.totalorder %s32, 0
      %p134 = por %p132, %p133
      %p135 = scmp.ne.s32.totalorder %s127, %s129
      %p136 = scmp.eq.s32.totalorder %s37, 1
      %p137 = por %p135, %p136
      %p138 = scmp.ne.s32.totalorder %s129, %s130
      %p139 = scmp.eq.s32.totalorder %s37, 0
      %p140 = por %p138, %p139
      %p141 = scmp.ne.s32.totalorder %s129, %s130
      %p142 = scmp.eq.s32.totalorder %s38, 1
      %p143 = por %p141, %p142
      %p145 = scmp.ne.s32.totalorder %s130, %s144
      %p146 = scmp.eq.s32.totalorder %s38, 0
      %p147 = por %p145, %p146
      %s149 = sadd.s32 %s148, 1
      %p152 = scmp.eq.s32.totalorder %s32, 1
      %p153 = scmp.ne.s32.totalorder %s148, %s150
      %p154 = scmp.eq.s32.totalorder %s32, 0
      %p155 = por %p153, %p154
      %p156 = scmp.ne.s32.totalorder %s148, %s150
      %p157 = scmp.eq.s32.totalorder %s37, 1
      %p158 = por %p156, %p157
      %p159 = scmp.ne.s32.totalorder %s150, %s151
      %p160 = scmp.eq.s32.totalorder %s37, 0
      %p161 = por %p159, %p160
      %p162 = scmp.ne.s32.totalorder %s150, %s151
      %p163 = scmp.eq.s32.totalorder %s38, 1
      %p164 = por %p162, %p163
      %p166 = scmp.ne.s32.totalorder %s151, %s165
      %p167 = scmp.eq.s32.totalorder %s38, 0
      %p168 = por %p166, %p167
      %s170 = sadd.s32 %s169, 1
      %p173 = scmp.eq.s32.totalorder %s32, 1
      %p174 = scmp.ne.s32.totalorder %s169, %s171
      %p175 = scmp.eq.s32.totalorder %s32, 0
      %p176 = por %p174, %p175
      %p177 = scmp.ne.s32.totalorder %s169, %s171
      %p178 = scmp.eq.s32.totalorder %s37, 1
      %p179 = por %p177, %p178
      %p180 = scmp.ne.s32.totalorder %s171, %s172
      %p181 = scmp.eq.s32.totalorder %s37, 0
      %p182 = por %p180, %p181
      %p183 = scmp.ne.s32.totalorder %s171, %s172
      %p184 = scmp.eq.s32.totalorder %s38, 1
      %p185 = por %p183, %p184
      %p187 = scmp.ne.s32.totalorder %s172, %s186
      %p188 = scmp.eq.s32.totalorder %s38, 0
      %p189 = por %p187, %p188
      %s191 = sadd.s32 %s190, 1
      %p194 = scmp.eq.s32.totalorder %s32, 1
      %p195 = scmp.ne.s32.totalorder %s190, %s192
      %p196 = scmp.eq.s32.totalorder %s32, 0
      %p197 = por %p195, %p196
      %p198 = scmp.ne.s32.totalorder %s190, %s192
      %p199 = scmp.eq.s32.totalorder %s37, 1
      %p200 = por %p198, %p199
      %p201 = scmp.ne.s32.totalorder %s192, %s193
      %p202 = scmp.eq.s32.totalorder %s37, 0
      %p203 = por %p201, %p202
      %p204 = scmp.ne.s32.totalorder %s192, %s193
      %p205 = scmp.eq.s32.totalorder %s38, 1
      %p206 = por %p204, %p205
      %p208 = scmp.ne.s32.totalorder %s193, %s207
      %p209 = scmp.eq.s32.totalorder %s38, 0
      %p210 = por %p208, %p209
      %s212 = sadd.s32 %s211, 1
      %p215 = scmp.eq.s32.totalorder %s32, 1
      %p216 = scmp.ne.s32.totalorder %s211, %s213
      %p217 = scmp.eq.s32.totalorder %s32, 0
      %p218 = por %p216, %p217
      %p219 = scmp.ne.s32.totalorder %s211, %s213
      %p220 = scmp.eq.s32.totalorder %s37, 1
      %p221 = por %p219, %p220
      %p222 = scmp.ne.s32.totalorder %s213, %s214
      %p223 = scmp.eq.s32.totalorder %s37, 0
      %p224 = por %p222, %p223
      %p225 = scmp.ne.s32.totalorder %s213, %s214
      %p226 = scmp.eq.s32.totalorder %s38, 1
      %p227 = por %p225, %p226
      %p229 = scmp.ne.s32.totalorder %s214, %s228
      %p230 = scmp.eq.s32.totalorder %s38, 0
      %p231 = por %p229, %p230
      %s233 = sadd.s32 %s232, 1
      %p236 = scmp.eq.s32.totalorder %s32, 1
      %p237 = scmp.ne.s32.totalorder %s232, %s234
      %p238 = scmp.eq.s32.totalorder %s32, 0
      %p239 = por %p237, %p238
      %p240 = scmp.ne.s32.totalorder %s232, %s234
      %p241 = scmp.eq.s32.totalorder %s37, 1
      %p242 = por %p240, %p241
      %p243 = scmp.ne.s32.totalorder %s234, %s235
      %p244 = scmp.eq.s32.totalorder %s37, 0
      %p245 = por %p243, %p244
      %p246 = scmp.ne.s32.totalorder %s234, %s235
      %p247 = scmp.eq.s32.totalorder %s38, 1
      %p248 = por %p246, %p247
      %p250 = scmp.ne.s32.totalorder %s235, %s249
      %p251 = scmp.eq.s32.totalorder %s38, 0
      %p252 = por %p250, %p251
      %s254 = sadd.s32 %s253, 1
      %p257 = scmp.eq.s32.totalorder %s32, 1
      %p258 = scmp.ne.s32.totalorder %s253, %s255
      %p259 = scmp.eq.s32.totalorder %s32, 0
      %p260 = por %p258, %p259
      %p261 = scmp.ne.s32.totalorder %s253, %s255
      %p262 = scmp.eq.s32.totalorder %s37, 1
      %p263 = por %p261, %p262
      %p264 = scmp.ne.s32.totalorder %s255, %s256
      %p265 = scmp.eq.s32.totalorder %s37, 0
      %p266 = por %p264, %p265
      %p267 = scmp.ne.s32.totalorder %s255, %s256
      %p268 = scmp.eq.s32.totalorder %s38, 1
      %p269 = por %p267, %p268
      %p271 = scmp.ne.s32.totalorder %s256, %s270
      %p272 = scmp.eq.s32.totalorder %s38, 0
      %p273 = por %p271, %p272
      %s275 = sadd.s32 %s274, 1
      %p278 = scmp.eq.s32.totalorder %s32, 1
      %p279 = scmp.ne.s32.totalorder %s274, %s276
      %p280 = scmp.eq.s32.totalorder %s32, 0
      %p281 = por %p279, %p280
      %p282 = scmp.ne.s32.totalorder %s274, %s276
      %p283 = scmp.eq.s32.totalorder %s37, 1
      %p284 = por %p282, %p283
      %p285 = scmp.ne.s32.totalorder %s276, %s277
      %p286 = scmp.eq.s32.totalorder %s37, 0
      %p287 = por %p285, %p286
      %p288 = scmp.ne.s32.totalorder %s276, %s277
      %p289 = scmp.eq.s32.totalorder %s38, 1
      %p290 = por %p288, %p289
      %p292 = scmp.ne.s32.totalorder %s277, %s291
      %p293 = scmp.eq.s32.totalorder %s38, 0
      %p294 = por %p292, %p293
      %s296 = sadd.s32 %s295, 1
      %p299 = scmp.eq.s32.totalorder %s32, 1
      %p300 = scmp.ne.s32.totalorder %s295, %s297
      %p301 = scmp.eq.s32.totalorder %s32, 0
      %p302 = por %p300, %p301
      %p303 = scmp.ne.s32.totalorder %s295, %s297
      %p304 = scmp.eq.s32.totalorder %s37, 1
      %p305 = por %p303, %p304
      %p306 = scmp.ne.s32.totalorder %s297, %s298
      %p307 = scmp.eq.s32.totalorder %s37, 0
      %p308 = por %p306, %p307
      %p309 = scmp.ne.s32.totalorder %s297, %s298
      %p310 = scmp.eq.s32.totalorder %s38, 1
      %p311 = por %p309, %p310
      %p313 = scmp.ne.s32.totalorder %s298, %s312
      %p314 = scmp.eq.s32.totalorder %s38, 0
      %p315 = por %p313, %p314
      %s317 = sadd.s32 %s316, 1
      %p320 = scmp.eq.s32.totalorder %s32, 1
      %p321 = scmp.ne.s32.totalorder %s316, %s318
      %p322 = scmp.eq.s32.totalorder %s32, 0
      %p323 = por %p321, %p322
      %p324 = scmp.ne.s32.totalorder %s316, %s318
      %p325 = scmp.eq.s32.totalorder %s37, 1
      %p326 = por %p324, %p325
      %p327 = scmp.ne.s32.totalorder %s318, %s319
      %p328 = scmp.eq.s32.totalorder %s37, 0
      %p329 = por %p327, %p328
      %p330 = scmp.ne.s32.totalorder %s318, %s319
      %p331 = scmp.eq.s32.totalorder %s38, 1
      %p332 = por %p330, %p331
      %p334 = scmp.ne.s32.totalorder %s319, %s333
      %p335 = scmp.eq.s32.totalorder %s38, 0
      %p336 = por %p334, %p335
      %s338 = sadd.s32 %s337, 1
      %p341 = scmp.eq.s32.totalorder %s32, 1
      %p342 = scmp.ne.s32.totalorder %s337, %s339
      %p343 = scmp.eq.s32.totalorder %s32, 0
      %p344 = por %p342, %p343
      %p345 = scmp.ne.s32.totalorder %s337, %s339
      %p346 = scmp.eq.s32.totalorder %s37, 1
      %p347 = por %p345, %p346
      %p348 = scmp.ne.s32.totalorder %s339, %s340
      %p349 = scmp.eq.s32.totalorder %s37, 0
      %p350 = por %p348, %p349
      %p351 = scmp.ne.s32.totalorder %s339, %s340
      %p352 = scmp.eq.s32.totalorder %s38, 1
      %p353 = por %p351, %p352
      %p355 = scmp.ne.s32.totalorder %s340, %s354
      %p356 = scmp.eq.s32.totalorder %s38, 0
      %p357 = por %p355, %p356
      %s359 = sadd.s32 %s358, 1
      %p362 = scmp.eq.s32.totalorder %s32, 1
      %p363 = scmp.ne.s32.totalorder %s358, %s360
      %p364 = scmp.eq.s32.totalorder %s32, 0
      %p365 = por %p363, %p364
      %p366 = scmp.ne.s32.totalorder %s358, %s360
      %p367 = scmp.eq.s32.totalorder %s37, 1
      %p368 = por %p366, %p367
      %p369 = scmp.ne.s32.totalorder %s360, %s361
      %p370 = scmp.eq.s32.totalorder %s37, 0
      %p371 = por %p369, %p370
      %p372 = scmp.ne.s32.totalorder %s360, %s361
      %p373 = scmp.eq.s32.totalorder %s38, 1
      %p374 = por %p372, %p373
      %p376 = scmp.ne.s32.totalorder %s361, %s375
      %p377 = scmp.eq.s32.totalorder %s38, 0
      %p378 = por %p376, %p377
      %s380 = sadd.s32 %s379, 1
      %p383 = scmp.eq.s32.totalorder %s32, 1
      %p384 = scmp.ne.s32.totalorder %s379, %s381
      %p385 = scmp.eq.s32.totalorder %s32, 0
      %p386 = por %p384, %p385
      %p387 = scmp.ne.s32.totalorder %s379, %s381
      %p388 = scmp.eq.s32.totalorder %s37, 1
      %p389 = por %p387, %p388
      %p390 = scmp.ne.s32.totalorder %s381, %s382
      %p391 = scmp.eq.s32.totalorder %s37, 0
      %p392 = por %p390, %p391
      %p393 = scmp.ne.s32.totalorder %s381, %s382
      %p394 = scmp.eq.s32.totalorder %s38, 1
      %p395 = por %p393, %p394
      %p397 = scmp.ne.s32.totalorder %s382, %s396
      %p398 = scmp.eq.s32.totalorder %s38, 0
      %p399 = por %p397, %p398
      %s401 = sadd.s32 %s400, 1
      %p404 = scmp.eq.s32.totalorder %s32, 1
      %p405 = scmp.ne.s32.totalorder %s400, %s402
      %p406 = scmp.eq.s32.totalorder %s32, 0
      %p407 = por %p405, %p406
      %p408 = scmp.ne.s32.totalorder %s400, %s402
      %p409 = scmp.eq.s32.totalorder %s37, 1
      %p410 = por %p408, %p409
      %p411 = scmp.ne.s32.totalorder %s402, %s403
      %p412 = scmp.eq.s32.totalorder %s37, 0
      %p413 = por %p411, %p412
      %p414 = scmp.ne.s32.totalorder %s402, %s403
      %p415 = scmp.eq.s32.totalorder %s38, 1
      %p416 = por %p414, %p415
      %p418 = scmp.ne.s32.totalorder %s403, %s417
      %p419 = scmp.eq.s32.totalorder %s38, 0
      %p420 = por %p418, %p419
      %s422 = sadd.s32 %s421, 1
      %p425 = scmp.eq.s32.totalorder %s32, 1
      %p426 = scmp.ne.s32.totalorder %s421, %s423
      %p427 = scmp.eq.s32.totalorder %s32, 0
      %p428 = por %p426, %p427
      %p429 = scmp.ne.s32.totalorder %s421, %s423
      %p430 = scmp.eq.s32.totalorder %s37, 1
      %p431 = por %p429, %p430
      %p432 = scmp.ne.s32.totalorder %s423, %s424
      %p433 = scmp.eq.s32.totalorder %s37, 0
      %p434 = por %p432, %p433
      %p435 = scmp.ne.s32.totalorder %s423, %s424
      %p436 = scmp.eq.s32.totalorder %s38, 1
      %p437 = por %p435, %p436
      %p439 = scmp.ne.s32.totalorder %s424, %s438
      %p440 = scmp.eq.s32.totalorder %s38, 0
      %p441 = por %p439, %p440
      %s442 = ssub.s32 %s39, %s51
      %s443 = ssub.s32 %s40, %s47
      %s444 = sor.u32 %s442, %s443
      %p445 = scmp.eq.s32.totalorder %s444, 0
      %s447 = sadd.s32 %s446, 1
      %s448 = scalar_select %p445, %s446, %s447
      %p451 = pneg %p445
      %p452 = scmp.eq.s32.totalorder %s32, 1
      %p453 = por %p451, %p452
      %p454 = scmp.ne.s32.totalorder %s446, %s449
      %p455 = scmp.eq.s32.totalorder %s32, 0
      %p456 = por %p454, %p455
      %p457 = scmp.ne.s32.totalorder %s446, %s449
      %p458 = scmp.eq.s32.totalorder %s37, 1
      %p459 = por %p457, %p458
      %p460 = scmp.ne.s32.totalorder %s449, %s450
      %p461 = scmp.eq.s32.totalorder %s37, 0
      %p462 = por %p460, %p461
      %p463 = scmp.ne.s32.totalorder %s449, %s450
      %p464 = scmp.eq.s32.totalorder %s38, 1
      %p465 = por %p463, %p464
      %p467 = scmp.ne.s32.totalorder %s450, %s466
      %p468 = scmp.eq.s32.totalorder %s38, 0
      %p469 = por %p467, %p468
      %p470 = scmp.le.s32.totalorder 1, %s32
      %p471 = scmp.lt.s32.totalorder %s32, 3
      %p472 = pnand %p470, %p471
      %p473 = pneg %p472
      // Predicated region
      $region9: #{tpu_custom_call.1} parent=5 // pred_check
        _
      $region10: #{tpu_custom_call.1} parent=5 // pred_check_branch
        %475 = sbr.rel (%p472) target = $region12
      $region11: #{tpu_custom_call.1} parent=5 // pred_region
        %s476 = ssub.s32 %s32, 1
        // Predicated region
        $region13: #{tpu_custom_call.1} parent=11 // pred_check
          %p477 = pneg %p119
        $region14: #{tpu_custom_call.1} parent=11 // pred_check_branch
          %479 = sbr.rel (%p477) target = $region16
        $region15: #{tpu_custom_call.1} parent=11 // pred_region
          _
        $region16: #{tpu_custom_call.1} parent=11 // pred_fallthru
          _
        // Predicated region
        $region17: #{tpu_custom_call.1} parent=11 // pred_check
          %p480 = pneg %p140
        $region18: #{tpu_custom_call.1} parent=11 // pred_check_branch
          %482 = sbr.rel (%p480) target = $region20
        $region19: #{tpu_custom_call.1} parent=11 // pred_region
          _
        $region20: #{tpu_custom_call.1} parent=11 // pred_fallthru
          _
        // Predicated region
        $region21: #{tpu_custom_call.1} parent=11 // pred_check
          %p483 = pneg %p161
        $region22: #{tpu_custom_call.1} parent=11 // pred_check_branch
          %485 = sbr.rel (%p483) target = $region24
        $region23: #{tpu_custom_call.1} parent=11 // pred_region
          %s487 = ssub.s32 256, 256
          %488 = vsyncadd [#allocation3], %s487
          %s489 = sshll.u32 [#allocation2], 4
          %s490 = int_to_ptr.vmem [resolvable:$true] %s489
          %495 = dma.hbm_to_vmem [thread:$0]  %s4, 256, %s490, [#allocation3], 64, 64, 4
        $region24: #{tpu_custom_call.1} parent=11 // pred_fallthru
          _
        // Predicated region
        $region25: #{tpu_custom_call.1} parent=11 // pred_check
          %p496 = pneg %p182
        $region26: #{tpu_custom_call.1} parent=11 // pred_check_branch
          %498 = sbr.rel (%p496) target = $region28
        $region27: #{tpu_custom_call.1} parent=11 // pred_region
          _
        $region28: #{tpu_custom_call.1} parent=11 // pred_fallthru
          _
        // Predicated region
        $region29: #{tpu_custom_call.1} parent=11 // pred_check
          %p499 = pneg %p203
        $region30: #{tpu_custom_call.1} parent=11 // pred_check_branch
          %501 = sbr.rel (%p499) target = $region32
        $region31: #{tpu_custom_call.1} parent=11 // pred_region
          %s503 = ssub.s32 256, 256
          %504 = vsyncadd [#allocation6], %s503
          %s505 = sshll.u32 [#allocation5], 4
          %s506 = int_to_ptr.vmem [resolvable:$true] %s505
          %511 = dma.hbm_to_vmem [thread:$0]  %s6, 256, %s506, [#allocation6], 64, 64, 4
        $region32: #{tpu_custom_call.1} parent=11 // pred_fallthru
          _
        // Predicated region
        $region33: #{tpu_custom_call.1} parent=11 // pred_check
          %p512 = pneg %p224
        $region34: #{tpu_custom_call.1} parent=11 // pred_check_branch
          %514 = sbr.rel (%p512) target = $region36
        $region35: #{tpu_custom_call.1} parent=11 // pred_region
          %s516 = ssub.s32 64, 64
          %517 = vsyncadd [#allocation6], %s516
          %s518 = sshll.u32 [#allocation7], 4
          %s519 = int_to_ptr.vmem [resolvable:$true] %s518
          %524 = dma.hbm_to_vmem [thread:$0]  %s7, 64, %s519, [#allocation6], 16, 16, 1
        $region36: #{tpu_custom_call.1} parent=11 // pred_fallthru
          _
        // Predicated region
        $region37: #{tpu_custom_call.1} parent=11 // pred_check
          %p525 = pneg %p245
        $region38: #{tpu_custom_call.1} parent=11 // pred_check_branch
          %527 = sbr.rel (%p525) target = $region40
        $region39: #{tpu_custom_call.1} parent=11 // pred_region
          %s529 = ssub.s32 256, 256
          %530 = vsyncadd [#allocation9], %s529
          %s531 = sshll.u32 [#allocation8], 4
          %s532 = int_to_ptr.vmem [resolvable:$true] %s531
          %537 = dma.hbm_to_vmem [thread:$0]  %s8, 256, %s532, [#allocation9], 64, 64, 4
        $region40: #{tpu_custom_call.1} parent=11 // pred_fallthru
          _
        // Predicated region
        $region41: #{tpu_custom_call.1} parent=11 // pred_check
          %p538 = pneg %p266
        $region42: #{tpu_custom_call.1} parent=11 // pred_check_branch
          %540 = sbr.rel (%p538) target = $region44
        $region43: #{tpu_custom_call.1} parent=11 // pred_region
          _
        $region44: #{tpu_custom_call.1} parent=11 // pred_fallthru
          _
        // Predicated region
        $region45: #{tpu_custom_call.1} parent=11 // pred_check
          %p541 = pneg %p287
        $region46: #{tpu_custom_call.1} parent=11 // pred_check_branch
          %543 = sbr.rel (%p541) target = $region48
        $region47: #{tpu_custom_call.1} parent=11 // pred_region
          %s545 = ssub.s32 16, 16
          %546 = vsyncadd [#allocation9], %s545
          %s548 = sshll.u32 [#allocation10], 4
          %s549 = int_to_ptr.vmem [resolvable:$true] %s548
          %551 = dma.hbm_to_vmem [thread:$0]  %s10, 16, %s549, [#allocation9]
        $region48: #{tpu_custom_call.1} parent=11 // pred_fallthru
          _
        // Predicated region
        $region49: #{tpu_custom_call.1} parent=11 // pred_check
          %p552 = pneg %p308
        $region50: #{tpu_custom_call.1} parent=11 // pred_check_branch
          %554 = sbr.rel (%p552) target = $region52
        $region51: #{tpu_custom_call.1} parent=11 // pred_region
          %s556 = ssub.s32 16, 16
          %557 = vsyncadd [#allocation12], %s556
          %s559 = sshll.u32 [#allocation11], 4
          %s560 = int_to_ptr.vmem [resolvable:$true] %s559
          %562 = dma.hbm_to_vmem [thread:$0]  %s11, 16, %s560, [#allocation12]
        $region52: #{tpu_custom_call.1} parent=11 // pred_fallthru
          _
        // Predicated region
        $region53: #{tpu_custom_call.1} parent=11 // pred_check
          %p563 = pneg %p329
        $region54: #{tpu_custom_call.1} parent=11 // pred_check_branch
          %565 = sbr.rel (%p563) target = $region56
        $region55: #{tpu_custom_call.1} parent=11 // pred_region
          %s567 = ssub.s32 256, 256
          %568 = vsyncadd [#allocation12], %s567
          %s569 = sshll.u32 [#allocation13], 4
          %s570 = int_to_ptr.vmem [resolvable:$true] %s569
          %575 = dma.hbm_to_vmem [thread:$0]  %s12, 256, %s570, [#allocation12], 64, 64, 4
        $region56: #{tpu_custom_call.1} parent=11 // pred_fallthru
          _
        // Predicated region
        $region57: #{tpu_custom_call.1} parent=11 // pred_check
          %p576 = pneg %p350
        $region58: #{tpu_custom_call.1} parent=11 // pred_check_branch
          %578 = sbr.rel (%p576) target = $region60
        $region59: #{tpu_custom_call.1} parent=11 // pred_region
          %s580 = ssub.s32 16, 16
          %581 = vsyncadd [#allocation15], %s580
          %s583 = sshll.u32 [#allocation14], 4
          %s584 = int_to_ptr.vmem [resolvable:$true] %s583
          %586 = dma.hbm_to_vmem [thread:$0]  %s13, 16, %s584, [#allocation15]
        $region60: #{tpu_custom_call.1} parent=11 // pred_fallthru
          _
        // Predicated region
        $region61: #{tpu_custom_call.1} parent=11 // pred_check
          %p587 = pneg %p371
        $region62: #{tpu_custom_call.1} parent=11 // pred_check_branch
          %589 = sbr.rel (%p587) target = $region64
        $region63: #{tpu_custom_call.1} parent=11 // pred_region
          _
        $region64: #{tpu_custom_call.1} parent=11 // pred_fallthru
          _
        // Predicated region
        $region65: #{tpu_custom_call.1} parent=11 // pred_check
          %p590 = pneg %p392
        $region66: #{tpu_custom_call.1} parent=11 // pred_check_branch
          %592 = sbr.rel (%p590) target = $region68
        $region67: #{tpu_custom_call.1} parent=11 // pred_region
          _
        $region68: #{tpu_custom_call.1} parent=11 // pred_fallthru
          _
        // Predicated region
        $region69: #{tpu_custom_call.1} parent=11 // pred_check
          %p593 = pneg %p413
        $region70: #{tpu_custom_call.1} parent=11 // pred_check_branch
          %595 = sbr.rel (%p593) target = $region72
        $region71: #{tpu_custom_call.1} parent=11 // pred_region
          _
        $region72: #{tpu_custom_call.1} parent=11 // pred_fallthru
          _
        // Predicated region
        $region73: #{tpu_custom_call.1} parent=11 // pred_check
          %p596 = pneg %p434
        $region74: #{tpu_custom_call.1} parent=11 // pred_check_branch
          %598 = sbr.rel (%p596) target = $region76
        $region75: #{tpu_custom_call.1} parent=11 // pred_region
          _
        $region76: #{tpu_custom_call.1} parent=11 // pred_fallthru
          _
      $region12: #{tpu_custom_call.1} parent=5 // pred_fallthru
        _
      %p599 = scmp.lt.s32.totalorder %s32, 2
      // Predicated region
      $region77: #{tpu_custom_call.1} parent=5 // pred_check
        %p600 = pneg %p599
      $region78: #{tpu_custom_call.1} parent=5 // pred_check_branch
        %602 = sbr.rel (%p600) target = $region80
      $region79: #{tpu_custom_call.1} parent=5 // pred_region
        // Predicated region
        $region81: #{tpu_custom_call.1} parent=79 // pred_check
          %p603 = pneg %p66
        $region82: #{tpu_custom_call.1} parent=79 // pred_check_branch
          %605 = sbr.rel (%p603) target = $region84
        $region83: #{tpu_custom_call.1} parent=79 // pred_region
          %p606 = scmp.lt.s32.totalorder %s39, 1
          %s607 = scalar_select %p606, %s39, 1
          %p608 = scmp.lt.s32.totalorder %s40, 0
          %s609 = scalar_select %p608, %s40, 0
          %s610 = sadd.s32 %s609, %s607
          %s611 = smul.addr %s610, 8
          %s612 = scalar_lea.vmem %s0, %s611
        $region84: #{tpu_custom_call.1} parent=79 // pred_fallthru
          _
        // Predicated region
        $region85: #{tpu_custom_call.1} parent=79 // pred_check
          %p613 = pneg %p92
        $region86: #{tpu_custom_call.1} parent=79 // pred_check_branch
          %615 = sbr.rel (%p613) target = $region88
        $region87: #{tpu_custom_call.1} parent=79 // pred_region
          %p616 = scmp.lt.s32.totalorder %s39, 1
          %s617 = scalar_select %p616, %s39, 1
          %s618 = smul.addr %s617, 8
          %s619 = scalar_lea.vmem %s1, %s618
        $region88: #{tpu_custom_call.1} parent=79 // pred_fallthru
          _
      $region80: #{tpu_custom_call.1} parent=5 // pred_fallthru
        _
      %p620 = scmp.le.s32.totalorder 1, %s32
      %p621 = scmp.lt.s32.totalorder %s32, 3
      %p622 = pnand %p620, %p621
      %p623 = pneg %p622
      // Predicated region
      $region89: #{tpu_custom_call.1} parent=5 // pred_check
        _
      $region90: #{tpu_custom_call.1} parent=5 // pred_check_branch
        %625 = sbr.rel (%p622) target = $region92
      $region91: #{tpu_custom_call.1} parent=5 // pred_region
        %s626 = ssub.s32 %s32, 1
        // Predicated region
        $region93: #{tpu_custom_call.1} parent=91 // pred_check
          %p627 = pneg %p161
        $region94: #{tpu_custom_call.1} parent=91 // pred_check_branch
          %629 = sbr.rel (%p627) target = $region96
        $region95: #{tpu_custom_call.1} parent=91 // pred_region
          %630 = dma.done [#allocation3], 256
        $region96: #{tpu_custom_call.1} parent=91 // pred_fallthru
          _
        // Predicated region
        $region97: #{tpu_custom_call.1} parent=91 // pred_check
          %p631 = pneg %p203
        $region98: #{tpu_custom_call.1} parent=91 // pred_check_branch
          %633 = sbr.rel (%p631) target = $region100
        $region99: #{tpu_custom_call.1} parent=91 // pred_region
          %634 = dma.done [#allocation6], 256
        $region100: #{tpu_custom_call.1} parent=91 // pred_fallthru
          _
        // Predicated region
        $region101: #{tpu_custom_call.1} parent=91 // pred_check
          %p635 = pneg %p224
        $region102: #{tpu_custom_call.1} parent=91 // pred_check_branch
          %637 = sbr.rel (%p635) target = $region104
        $region103: #{tpu_custom_call.1} parent=91 // pred_region
          %638 = dma.done [#allocation6], 64
        $region104: #{tpu_custom_call.1} parent=91 // pred_fallthru
          _
        // Predicated region
        $region105: #{tpu_custom_call.1} parent=91 // pred_check
          %p639 = pneg %p245
        $region106: #{tpu_custom_call.1} parent=91 // pred_check_branch
          %641 = sbr.rel (%p639) target = $region108
        $region107: #{tpu_custom_call.1} parent=91 // pred_region
          %642 = dma.done [#allocation9], 256
        $region108: #{tpu_custom_call.1} parent=91 // pred_fallthru
          _
        // Predicated region
        $region109: #{tpu_custom_call.1} parent=91 // pred_check
          %p643 = pneg %p287
        $region110: #{tpu_custom_call.1} parent=91 // pred_check_branch
          %645 = sbr.rel (%p643) target = $region112
        $region111: #{tpu_custom_call.1} parent=91 // pred_region
          %646 = dma.done [#allocation9], 16
        $region112: #{tpu_custom_call.1} parent=91 // pred_fallthru
          _
        // Predicated region
        $region113: #{tpu_custom_call.1} parent=91 // pred_check
          %p647 = pneg %p308
        $region114: #{tpu_custom_call.1} parent=91 // pred_check_branch
          %649 = sbr.rel (%p647) target = $region116
        $region115: #{tpu_custom_call.1} parent=91 // pred_region
          %650 = dma.done [#allocation12], 16
        $region116: #{tpu_custom_call.1} parent=91 // pred_fallthru
          _
        // Predicated region
        $region117: #{tpu_custom_call.1} parent=91 // pred_check
          %p651 = pneg %p329
        $region118: #{tpu_custom_call.1} parent=91 // pred_check_branch
          %653 = sbr.rel (%p651) target = $region120
        $region119: #{tpu_custom_call.1} parent=91 // pred_region
          %654 = dma.done [#allocation12], 256
        $region120: #{tpu_custom_call.1} parent=91 // pred_fallthru
          _
        // Predicated region
        $region121: #{tpu_custom_call.1} parent=91 // pred_check
          %p655 = pneg %p350
        $region122: #{tpu_custom_call.1} parent=91 // pred_check_branch
          %657 = sbr.rel (%p655) target = $region124
        $region123: #{tpu_custom_call.1} parent=91 // pred_region
          %658 = dma.done [#allocation15], 16
        $region124: #{tpu_custom_call.1} parent=91 // pred_fallthru
          _
        %p659 = scmp.lt.s32.totalorder %s41, 1
        %s660 = scalar_select %p659, %s41, 1
        %p661 = scmp.lt.s32.totalorder %s42, 0
        %s662 = scalar_select %p661, %s42, 0
        %s663 = sadd.s32 %s662, %s660
        %s664 = smul.addr %s663, 8
        %s665 = scalar_lea.vmem %s0, %s664
        %p666 = pneg %p72
        %p667 = pneg %p69
        %p668 = scmp.lt.s32.totalorder %s41, 1
        %s669 = scalar_select %p668, %s41, 1
        %s670 = smul.addr %s669, 8
        %s671 = scalar_lea.vmem %s1, %s670
        %p672 = pneg %p98
        %p673 = pneg %p95
        %p674 = pneg %p119
        %p675 = pneg %p116
        %p676 = pneg %p140
        %p677 = pneg %p137
        %p678 = pneg %p161
        %p679 = pneg %p158
        %p680 = pneg %p182
        %p681 = pneg %p179
        %p682 = pneg %p203
        %p683 = pneg %p200
        %p684 = pneg %p224
        %p685 = pneg %p221
        %p686 = pneg %p245
        %p687 = pneg %p242
        %p688 = pneg %p266
        %p689 = pneg %p263
        %p690 = pneg %p287
        %p691 = pneg %p284
        %p692 = pneg %p308
        %p693 = pneg %p305
        %p694 = pneg %p329
        %p695 = pneg %p326
        %p696 = pneg %p350
        %p697 = pneg %p347
        %p698 = pneg %p371
        %p699 = pneg %p368
        %p700 = pneg %p392
        %p701 = pneg %p389
        %p702 = pneg %p413
        %p703 = pneg %p410
        %p704 = pneg %p434
        %p705 = pneg %p431
        %p706 = pneg %p462
        %p707 = pneg %p459
        %s708 = sand.u32 %s449, 1
        %s709 = scalar_lea.sflag [#allocation4], %s708
        %s710 = sand.u32 %s449, 1
        %s711 = smul.addr %s710, 8
        %s712 = scalar_lea.vmem [#allocation16], %s711
        %p713 = scmp.lt.s32.totalorder %s41, 1
        %s714 = scalar_select %p713, %s41, 1
        %p715 = scmp.lt.s32.totalorder %s42, 0
        %s716 = scalar_select %p715, %s42, 0
        %s717 = sadd.s32 %s716, %s714
        %s718 = smul.addr %s717, 8
        %s719 = scalar_lea.vmem %s0, %s718
        %p720 = scmp.lt.s32.totalorder %s41, 1
        %s721 = scalar_select %p720, %s41, 1
        %s722 = smul.addr %s721, 8
        %s723 = scalar_lea.vmem %s1, %s722
        %v725 = vld [vmem:[%s719] sm:$0xff]
        %v726 = vld [vmem:[%s723] sm:$0xff]
        %v727 = vpack.c.bf16 %v725, %v725
        %v728 = vpack.c.bf16 %v726, %v726
        %v729 = vld [vmem:[%s2] sm:$0xf]
        %v730 = vld [vmem:[%s2 + $0x4] sm:$0xf]
        %v731 = vld [vmem:[%s2 + $0x8] sm:$0xf]
        %v732 = vld [vmem:[%s2 + $0xc] sm:$0xf]
        %v733 = vld [vmem:[%s3] sm:$0x1]
        %v734 = vld [vmem:[%s3 + $0x1] sm:$0x1]
        %v735 = vld [vmem:[%s3 + $0x2] sm:$0x1]
        %v736 = vld [vmem:[%s3 + $0x3] sm:$0x1]
        %v741 = vlaneseq
        %v742 = vshrl.u32 %v741, 7
        %v743 = vsub.s32 0, %v742
        %v744 = vrot.slane %v733, %v743
        %v745 = vlaneseq
        %v746 = vshrl.u32 %v745, 7
        %v747 = vsub.s32 0, %v746
        %v748 = vrot.slane %v734, %v747
        %v749 = vlaneseq
        %v750 = vshrl.u32 %v749, 7
        %v751 = vsub.s32 0, %v750
        %v752 = vrot.slane %v735, %v751
        %v753 = vlaneseq
        %v754 = vshrl.u32 %v753, 7
        %v755 = vsub.s32 0, %v754
        %v756 = vrot.slane %v736, %v755
        %vm761 = vcmask 261120
        %v763 = vsel %vm761, %v727, 0
        %v766 = vsel %vm761, %v729, 0
        %768 = vmatprep.subr.bf16.mxu0 0
        %769 = vmatpush1.bf16.xpose.msra.mxu0 0
        %770 = vmatprep.subr.bf16.mxu0 0
        %771 = vmatpush1.bf16.xpose.msra.mxu0 0
        %772 = vmatprep.subr.bf16.mxu0 0
        %773 = vmatpush1.bf16.xpose.msra.mxu0 0
        %774 = vmatprep.subr.bf16.mxu0 0
        %775 = vmatpush1.bf16.xpose.msra.mxu0 0
        %776 = vmatprep.subr.bf16.mxu0 0
        %777 = vmatpush1.bf16.xpose.msra.mxu0 0
        %778 = vmatprep.subr.bf16.mxu0 0
        %779 = vmatpush1.bf16.xpose.msra.mxu0 0
        %780 = vmatprep.subr.bf16.mxu0 0
        %781 = vmatpush1.bf16.xpose.msra.mxu0 0
        %782 = vmatprep.subr.bf16.mxu0 0
        %783 = vmatpush1.bf16.xpose.msra.mxu0 %v766
        %784 = vmatprep.subr.bf16.mxu0 0
        %785 = vmatpush2.bf16.xpose.msra.mxu0 0
        %786 = vmatprep.subr.bf16.mxu0 0
        %787 = vmatpush2.bf16.xpose.msra.mxu0 0
        %788 = vmatprep.subr.bf16.mxu0 0
        %789 = vmatpush2.bf16.xpose.msra.mxu0 0
        %790 = vmatprep.subr.bf16.mxu0 0
        %791 = vmatpush2.bf16.xpose.msra.mxu0 0
        %792 = vmatprep.subr.bf16.mxu0 0
        %793 = vmatpush2.bf16.xpose.msra.mxu0 0
        %794 = vmatprep.subr.bf16.mxu0 0
        %795 = vmatpush2.bf16.xpose.msra.mxu0 0
        %796 = vmatprep.subr.bf16.mxu0 0
        %797 = vmatpush2.bf16.xpose.msra.mxu0 0
        %798 = vmatprep.subr.bf16.mxu0 0
        %799 = vmatpush2.bf16.xpose.msra.mxu0 0
        %800 = vmatprep.mubr.bf16.mxu0 0
        %801 = vmatmul.mubr.bf16.gmra.mxu0 %v763
        %v802 = vpop.f32.mrf.mxu0
        %v803 = vadd.f32 %v744, %v802
        %v804 = vpop.f32.mrf.mxu0
        %v805 = vpop.f32.mrf.mxu0
        %v806 = vpop.f32.mrf.mxu0
        %807 = vdwg.mxu0
        %v809 = vsel %vm761, %v730, 0
        %811 = vmatprep.subr.bf16.mxu0 0
        %812 = vmatpush1.bf16.xpose.msra.mxu0 0
        %813 = vmatprep.subr.bf16.mxu0 0
        %814 = vmatpush1.bf16.xpose.msra.mxu0 0
        %815 = vmatprep.subr.bf16.mxu0 0
        %816 = vmatpush1.bf16.xpose.msra.mxu0 0
        %817 = vmatprep.subr.bf16.mxu0 0
        %818 = vmatpush1.bf16.xpose.msra.mxu0 0
        %819 = vmatprep.subr.bf16.mxu0 0
        %820 = vmatpush1.bf16.xpose.msra.mxu0 0
        %821 = vmatprep.subr.bf16.mxu0 0
        %822 = vmatpush1.bf16.xpose.msra.mxu0 0
        %823 = vmatprep.subr.bf16.mxu0 0
        %824 = vmatpush1.bf16.xpose.msra.mxu0 0
        %825 = vmatprep.subr.bf16.mxu0 0
        %826 = vmatpush1.bf16.xpose.msra.mxu0 %v809
        %827 = vmatprep.subr.bf16.mxu0 0
        %828 = vmatpush2.bf16.xpose.msra.mxu0 0
        %829 = vmatprep.subr.bf16.mxu0 0
        %830 = vmatpush2.bf16.xpose.msra.mxu0 0
        %831 = vmatprep.subr.bf16.mxu0 0
        %832 = vmatpush2.bf16.xpose.msra.mxu0 0
        %833 = vmatprep.subr.bf16.mxu0 0
        %834 = vmatpush2.bf16.xpose.msra.mxu0 0
        %835 = vmatprep.subr.bf16.mxu0 0
        %836 = vmatpush2.bf16.xpose.msra.mxu0 0
        %837 = vmatprep.subr.bf16.mxu0 0
        %838 = vmatpush2.bf16.xpose.msra.mxu0 0
        %839 = vmatprep.subr.bf16.mxu0 0
        %840 = vmatpush2.bf16.xpose.msra.mxu0 0
        %841 = vmatprep.subr.bf16.mxu0 0
        %842 = vmatpush2.bf16.xpose.msra.mxu0 0
        %843 = vmatprep.mubr.bf16.mxu0 0
        %844 = vmatmul.mubr.bf16.gmra.mxu0 %v763
        %v845 = vpop.f32.mrf.mxu0
        %v846 = vadd.f32 %v748, %v845
        %v847 = vpop.f32.mrf.mxu0
        %v848 = vpop.f32.mrf.mxu0
        %v849 = vpop.f32.mrf.mxu0
        %850 = vdwg.mxu0
        %v852 = vsel %vm761, %v731, 0
        %854 = vmatprep.subr.bf16.mxu0 0
        %855 = vmatpush1.bf16.xpose.msra.mxu0 0
        %856 = vmatprep.subr.bf16.mxu0 0
        %857 = vmatpush1.bf16.xpose.msra.mxu0 0
        %858 = vmatprep.subr.bf16.mxu0 0
        %859 = vmatpush1.bf16.xpose.msra.mxu0 0
        %860 = vmatprep.subr.bf16.mxu0 0
        %861 = vmatpush1.bf16.xpose.msra.mxu0 0
        %862 = vmatprep.subr.bf16.mxu0 0
        %863 = vmatpush1.bf16.xpose.msra.mxu0 0
        %864 = vmatprep.subr.bf16.mxu0 0
        %865 = vmatpush1.bf16.xpose.msra.mxu0 0
        %866 = vmatprep.subr.bf16.mxu0 0
        %867 = vmatpush1.bf16.xpose.msra.mxu0 0
        %868 = vmatprep.subr.bf16.mxu0 0
        %869 = vmatpush1.bf16.xpose.msra.mxu0 %v852
        %870 = vmatprep.subr.bf16.mxu0 0
        %871 = vmatpush2.bf16.xpose.msra.mxu0 0
        %872 = vmatprep.subr.bf16.mxu0 0
        %873 = vmatpush2.bf16.xpose.msra.mxu0 0
        %874 = vmatprep.subr.bf16.mxu0 0
        %875 = vmatpush2.bf16.xpose.msra.mxu0 0
        %876 = vmatprep.subr.bf16.mxu0 0
        %877 = vmatpush2.bf16.xpose.msra.mxu0 0
        %878 = vmatprep.subr.bf16.mxu0 0
        %879 = vmatpush2.bf16.xpose.msra.mxu0 0
        %880 = vmatprep.subr.bf16.mxu0 0
        %881 = vmatpush2.bf16.xpose.msra.mxu0 0
        %882 = vmatprep.subr.bf16.mxu0 0
        %883 = vmatpush2.bf16.xpose.msra.mxu0 0
        %884 = vmatprep.subr.bf16.mxu0 0
        %885 = vmatpush2.bf16.xpose.msra.mxu0 0
        %886 = vmatprep.mubr.bf16.mxu0 0
        %887 = vmatmul.mubr.bf16.gmra.mxu0 %v763
        %v888 = vpop.f32.mrf.mxu0
        %v889 = vadd.f32 %v752, %v888
        %v890 = vpop.f32.mrf.mxu0
        %v891 = vpop.f32.mrf.mxu0
        %v892 = vpop.f32.mrf.mxu0
        %893 = vdwg.mxu0
        %v895 = vsel %vm761, %v732, 0
        %897 = vmatprep.subr.bf16.mxu0 0
        %898 = vmatpush1.bf16.xpose.msra.mxu0 0
        %899 = vmatprep.subr.bf16.mxu0 0
        %900 = vmatpush1.bf16.xpose.msra.mxu0 0
        %901 = vmatprep.subr.bf16.mxu0 0
        %902 = vmatpush1.bf16.xpose.msra.mxu0 0
        %903 = vmatprep.subr.bf16.mxu0 0
        %904 = vmatpush1.bf16.xpose.msra.mxu0 0
        %905 = vmatprep.subr.bf16.mxu0 0
        %906 = vmatpush1.bf16.xpose.msra.mxu0 0
        %907 = vmatprep.subr.bf16.mxu0 0
        %908 = vmatpush1.bf16.xpose.msra.mxu0 0
        %909 = vmatprep.subr.bf16.mxu0 0
        %910 = vmatpush1.bf16.xpose.msra.mxu0 0
        %911 = vmatprep.subr.bf16.mxu0 0
        %912 = vmatpush1.bf16.xpose.msra.mxu0 %v895
        %913 = vmatprep.subr.bf16.mxu0 0
        %914 = vmatpush2.bf16.xpose.msra.mxu0 0
        %915 = vmatprep.subr.bf16.mxu0 0
        %916 = vmatpush2.bf16.xpose.msra.mxu0 0
        %917 = vmatprep.subr.bf16.mxu0 0
        %918 = vmatpush2.bf16.xpose.msra.mxu0 0
        %919 = vmatprep.subr.bf16.mxu0 0
        %920 = vmatpush2.bf16.xpose.msra.mxu0 0
        %921 = vmatprep.subr.bf16.mxu0 0
        %922 = vmatpush2.bf16.xpose.msra.mxu0 0
        %923 = vmatprep.subr.bf16.mxu0 0
        %924 = vmatpush2.bf16.xpose.msra.mxu0 0
        %925 = vmatprep.subr.bf16.mxu0 0
        %926 = vmatpush2.bf16.xpose.msra.mxu0 0
        %927 = vmatprep.subr.bf16.mxu0 0
        %928 = vmatpush2.bf16.xpose.msra.mxu0 0
        %929 = vmatprep.mubr.bf16.mxu0 0
        %930 = vmatmul.mubr.bf16.gmra.mxu0 %v763
        %v931 = vpop.f32.mrf.mxu0
        %v932 = vadd.f32 %v756, %v931
        %v933 = vpop.f32.mrf.mxu0
        %v934 = vpop.f32.mrf.mxu0
        %v935 = vpop.f32.mrf.mxu0
        %936 = vdwg.mxu0
        %v937 = vld [vmem:[#allocation2] sm:$0xf]
        %v938 = vld [vmem:[#allocation2 + $0x4] sm:$0xf]
        %v939 = vld [vmem:[#allocation2 + $0x8] sm:$0xf]
        %v940 = vld [vmem:[#allocation2 + $0xc] sm:$0xf]
        %v941 = vld [vmem:[%s5] sm:$0x1]
        %v942 = vld [vmem:[%s5 + $0x1] sm:$0x1]
        %v943 = vld [vmem:[%s5 + $0x2] sm:$0x1]
        %v944 = vld [vmem:[%s5 + $0x3] sm:$0x1]
        %v949 = vlaneseq
        %v950 = vshrl.u32 %v949, 7
        %v951 = vsub.s32 0, %v950
        %v952 = vrot.slane %v941, %v951
        %v953 = vlaneseq
        %v954 = vshrl.u32 %v953, 7
        %v955 = vsub.s32 0, %v954
        %v956 = vrot.slane %v942, %v955
        %v957 = vlaneseq
        %v958 = vshrl.u32 %v957, 7
        %v959 = vsub.s32 0, %v958
        %v960 = vrot.slane %v943, %v959
        %v961 = vlaneseq
        %v962 = vshrl.u32 %v961, 7
        %v963 = vsub.s32 0, %v962
        %v964 = vrot.slane %v944, %v963
        %v970 = vsel %vm761, %v728, 0
        %v973 = vsel %vm761, %v937, 0
        %975 = vmatprep.subr.bf16.mxu0 0
        %976 = vmatpush1.bf16.xpose.msra.mxu0 0
        %977 = vmatprep.subr.bf16.mxu0 0
        %978 = vmatpush1.bf16.xpose.msra.mxu0 0
        %979 = vmatprep.subr.bf16.mxu0 0
        %980 = vmatpush1.bf16.xpose.msra.mxu0 0
        %981 = vmatprep.subr.bf16.mxu0 0
        %982 = vmatpush1.bf16.xpose.msra.mxu0 0
        %983 = vmatprep.subr.bf16.mxu0 0
        %984 = vmatpush1.bf16.xpose.msra.mxu0 0
        %985 = vmatprep.subr.bf16.mxu0 0
        %986 = vmatpush1.bf16.xpose.msra.mxu0 0
        %987 = vmatprep.subr.bf16.mxu0 0
        %988 = vmatpush1.bf16.xpose.msra.mxu0 0
        %989 = vmatprep.subr.bf16.mxu0 0
        %990 = vmatpush1.bf16.xpose.msra.mxu0 %v973
        %991 = vmatprep.subr.bf16.mxu0 0
        %992 = vmatpush2.bf16.xpose.msra.mxu0 0
        %993 = vmatprep.subr.bf16.mxu0 0
        %994 = vmatpush2.bf16.xpose.msra.mxu0 0
        %995 = vmatprep.subr.bf16.mxu0 0
        %996 = vmatpush2.bf16.xpose.msra.mxu0 0
        %997 = vmatprep.subr.bf16.mxu0 0
        %998 = vmatpush2.bf16.xpose.msra.mxu0 0
        %999 = vmatprep.subr.bf16.mxu0 0
        %1000 = vmatpush2.bf16.xpose.msra.mxu0 0
        %1001 = vmatprep.subr.bf16.mxu0 0
        %1002 = vmatpush2.bf16.xpose.msra.mxu0 0
        %1003 = vmatprep.subr.bf16.mxu0 0
        %1004 = vmatpush2.bf16.xpose.msra.mxu0 0
        %1005 = vmatprep.subr.bf16.mxu0 0
        %1006 = vmatpush2.bf16.xpose.msra.mxu0 0
        %1007 = vmatprep.mubr.bf16.mxu0 0
        %1008 = vmatmul.mubr.bf16.gmra.mxu0 %v970
        %v1009 = vpop.f32.mrf.mxu0
        %v1010 = vadd.f32 %v952, %v1009
        %v1011 = vpop.f32.mrf.mxu0
        %v1012 = vpop.f32.mrf.mxu0
        %v1013 = vpop.f32.mrf.mxu0
        %1014 = vdwg.mxu0
        %v1016 = vsel %vm761, %v938, 0
        %1018 = vmatprep.subr.bf16.mxu0 0
        %1019 = vmatpush1.bf16.xpose.msra.mxu0 0
        %1020 = vmatprep.subr.bf16.mxu0 0
        %1021 = vmatpush1.bf16.xpose.msra.mxu0 0
        %1022 = vmatprep.subr.bf16.mxu0 0
        %1023 = vmatpush1.bf16.xpose.msra.mxu0 0
        %1024 = vmatprep.subr.bf16.mxu0 0
        %1025 = vmatpush1.bf16.xpose.msra.mxu0 0
        %1026 = vmatprep.subr.bf16.mxu0 0
        %1027 = vmatpush1.bf16.xpose.msra.mxu0 0
        %1028 = vmatprep.subr.bf16.mxu0 0
        %1029 = vmatpush1.bf16.xpose.msra.mxu0 0
        %1030 = vmatprep.subr.bf16.mxu0 0
        %1031 = vmatpush1.bf16.xpose.msra.mxu0 0
        %1032 = vmatprep.subr.bf16.mxu0 0
        %1033 = vmatpush1.bf16.xpose.msra.mxu0 %v1016
        %1034 = vmatprep.subr.bf16.mxu0 0
        %1035 = vmatpush2.bf16.xpose.msra.mxu0 0
        %1036 = vmatprep.subr.bf16.mxu0 0
        %1037 = vmatpush2.bf16.xpose.msra.mxu0 0
        %1038 = vmatprep.subr.bf16.mxu0 0
        %1039 = vmatpush2.bf16.xpose.msra.mxu0 0
        %1040 = vmatprep.subr.bf16.mxu0 0
        %1041 = vmatpush2.bf16.xpose.msra.mxu0 0
        %1042 = vmatprep.subr.bf16.mxu0 0
        %1043 = vmatpush2.bf16.xpose.msra.mxu0 0
        %1044 = vmatprep.subr.bf16.mxu0 0
        %1045 = vmatpush2.bf16.xpose.msra.mxu0 0
        %1046 = vmatprep.subr.bf16.mxu0 0
        %1047 = vmatpush2.bf16.xpose.msra.mxu0 0
        %1048 = vmatprep.subr.bf16.mxu0 0
        %1049 = vmatpush2.bf16.xpose.msra.mxu0 0
        %1050 = vmatprep.mubr.bf16.mxu0 0
        %1051 = vmatmul.mubr.bf16.gmra.mxu0 %v970
        %v1052 = vpop.f32.mrf.mxu0
        %v1053 = vadd.f32 %v956, %v1052
        %v1054 = vpop.f32.mrf.mxu0
        %v1055 = vpop.f32.mrf.mxu0
        %v1056 = vpop.f32.mrf.mxu0
        %1057 = vdwg.mxu0
        %v1059 = vsel %vm761, %v939, 0
        %1061 = vmatprep.subr.bf16.mxu0 0
        %1062 = vmatpush1.bf16.xpose.msra.mxu0 0
        %1063 = vmatprep.subr.bf16.mxu0 0
        %1064 = vmatpush1.bf16.xpose.msra.mxu0 0
        %1065 = vmatprep.subr.bf16.mxu0 0
        %1066 = vmatpush1.bf16.xpose.msra.mxu0 0
        %1067 = vmatprep.subr.bf16.mxu0 0
        %1068 = vmatpush1.bf16.xpose.msra.mxu0 0
        %1069 = vmatprep.subr.bf16.mxu0 0
        %1070 = vmatpush1.bf16.xpose.msra.mxu0 0
        %1071 = vmatprep.subr.bf16.mxu0 0
        %1072 = vmatpush1.bf16.xpose.msra.mxu0 0
        %1073 = vmatprep.subr.bf16.mxu0 0
        %1074 = vmatpush1.bf16.xpose.msra.mxu0 0
        %1075 = vmatprep.subr.bf16.mxu0 0
        %1076 = vmatpush1.bf16.xpose.msra.mxu0 %v1059
        %1077 = vmatprep.subr.bf16.mxu0 0
        %1078 = vmatpush2.bf16.xpose.msra.mxu0 0
        %1079 = vmatprep.subr.bf16.mxu0 0
        %1080 = vmatpush2.bf16.xpose.msra.mxu0 0
        %1081 = vmatprep.subr.bf16.mxu0 0
        %1082 = vmatpush2.bf16.xpose.msra.mxu0 0
        %1083 = vmatprep.subr.bf16.mxu0 0
        %1084 = vmatpush2.bf16.xpose.msra.mxu0 0
        %1085 = vmatprep.subr.bf16.mxu0 0
        %1086 = vmatpush2.bf16.xpose.msra.mxu0 0
        %1087 = vmatprep.subr.bf16.mxu0 0
        %1088 = vmatpush2.bf16.xpose.msra.mxu0 0
        %1089 = vmatprep.subr.bf16.mxu0 0
        %1090 = vmatpush2.bf16.xpose.msra.mxu0 0
        %1091 = vmatprep.subr.bf16.mxu0 0
        %1092 = vmatpush2.bf16.xpose.msra.mxu0 0
        %1093 = vmatprep.mubr.bf16.mxu0 0
        %1094 = vmatmul.mubr.bf16.gmra.mxu0 %v970
        %v1095 = vpop.f32.mrf.mxu0
        %v1096 = vadd.f32 %v960, %v1095
        %v1097 = vpop.f32.mrf.mxu0
        %v1098 = vpop.f32.mrf.mxu0
        %v1099 = vpop.f32.mrf.mxu0
        %1100 = vdwg.mxu0
        %v1102 = vsel %vm761, %v940, 0
        %1104 = vmatprep.subr.bf16.mxu0 0
        %1105 = vmatpush1.bf16.xpose.msra.mxu0 0
        %1106 = vmatprep.subr.bf16.mxu0 0
        %1107 = vmatpush1.bf16.xpose.msra.mxu0 0
        %1108 = vmatprep.subr.bf16.mxu0 0
        %1109 = vmatpush1.bf16.xpose.msra.mxu0 0
        %1110 = vmatprep.subr.bf16.mxu0 0
        %1111 = vmatpush1.bf16.xpose.msra.mxu0 0
        %1112 = vmatprep.subr.bf16.mxu0 0
        %1113 = vmatpush1.bf16.xpose.msra.mxu0 0
        %1114 = vmatprep.subr.bf16.mxu0 0
        %1115 = vmatpush1.bf16.xpose.msra.mxu0 0
        %1116 = vmatprep.subr.bf16.mxu0 0
        %1117 = vmatpush1.bf16.xpose.msra.mxu0 0
        %1118 = vmatprep.subr.bf16.mxu0 0
        %1119 = vmatpush1.bf16.xpose.msra.mxu0 %v1102
        %1120 = vmatprep.subr.bf16.mxu0 0
        %1121 = vmatpush2.bf16.xpose.msra.mxu0 0
        %1122 = vmatprep.subr.bf16.mxu0 0
        %1123 = vmatpush2.bf16.xpose.msra.mxu0 0
        %1124 = vmatprep.subr.bf16.mxu0 0
        %1125 = vmatpush2.bf16.xpose.msra.mxu0 0
        %1126 = vmatprep.subr.bf16.mxu0 0
        %1127 = vmatpush2.bf16.xpose.msra.mxu0 0
        %1128 = vmatprep.subr.bf16.mxu0 0
        %1129 = vmatpush2.bf16.xpose.msra.mxu0 0
        %1130 = vmatprep.subr.bf16.mxu0 0
        %1131 = vmatpush2.bf16.xpose.msra.mxu0 0
        %1132 = vmatprep.subr.bf16.mxu0 0
        %1133 = vmatpush2.bf16.xpose.msra.mxu0 0
        %1134 = vmatprep.subr.bf16.mxu0 0
        %1135 = vmatpush2.bf16.xpose.msra.mxu0 0
        %1136 = vmatprep.mubr.bf16.mxu0 0
        %1137 = vmatmul.mubr.bf16.gmra.mxu0 %v970
        %v1138 = vpop.f32.mrf.mxu0
        %v1139 = vadd.f32 %v964, %v1138
        %v1140 = vpop.f32.mrf.mxu0
        %v1141 = vpop.f32.mrf.mxu0
        %v1142 = vpop.f32.mrf.mxu0
        %1143 = vdwg.mxu0
        %v1144 = vld [vmem:[#allocation5] sm:$0xf]
        %v1145 = vld [vmem:[#allocation5 + $0x4] sm:$0xf]
        %v1146 = vld [vmem:[#allocation5 + $0x8] sm:$0xf]
        %v1147 = vld [vmem:[#allocation5 + $0xc] sm:$0xf]
        %v1148 = vld [vmem:[#allocation7] sm:$0x1]
        %v1149 = vld [vmem:[#allocation7 + $0x1] sm:$0x1]
        %v1150 = vld [vmem:[#allocation7 + $0x2] sm:$0x1]
        %v1151 = vld [vmem:[#allocation7 + $0x3] sm:$0x1]
        %v1156 = vlaneseq
        %v1157 = vshrl.u32 %v1156, 7
        %v1158 = vsub.s32 0, %v1157
        %v1159 = vrot.slane %v1148, %v1158
        %v1160 = vlaneseq
        %v1161 = vshrl.u32 %v1160, 7
        %v1162 = vsub.s32 0, %v1161
        %v1163 = vrot.slane %v1149, %v1162
        %v1164 = vlaneseq
        %v1165 = vshrl.u32 %v1164, 7
        %v1166 = vsub.s32 0, %v1165
        %v1167 = vrot.slane %v1150, %v1166
        %v1168 = vlaneseq
        %v1169 = vshrl.u32 %v1168, 7
        %v1170 = vsub.s32 0, %v1169
        %v1171 = vrot.slane %v1151, %v1170
        %v1177 = vsel %vm761, %v1144, 0
        %1179 = vmatprep.subr.bf16.mxu0 0
        %1180 = vmatpush1.bf16.xpose.msra.mxu0 0
        %1181 = vmatprep.subr.bf16.mxu0 0
        %1182 = vmatpush1.bf16.xpose.msra.mxu0 0
        %1183 = vmatprep.subr.bf16.mxu0 0
        %1184 = vmatpush1.bf16.xpose.msra.mxu0 0
        %1185 = vmatprep.subr.bf16.mxu0 0
        %1186 = vmatpush1.bf16.xpose.msra.mxu0 0
        %1187 = vmatprep.subr.bf16.mxu0 0
        %1188 = vmatpush1.bf16.xpose.msra.mxu0 0
        %1189 = vmatprep.subr.bf16.mxu0 0
        %1190 = vmatpush1.bf16.xpose.msra.mxu0 0
        %1191 = vmatprep.subr.bf16.mxu0 0
        %1192 = vmatpush1.bf16.xpose.msra.mxu0 0
        %1193 = vmatprep.subr.bf16.mxu0 0
        %1194 = vmatpush1.bf16.xpose.msra.mxu0 %v1177
        %1195 = vmatprep.subr.bf16.mxu0 0
        %1196 = vmatpush2.bf16.xpose.msra.mxu0 0
        %1197 = vmatprep.subr.bf16.mxu0 0
        %1198 = vmatpush2.bf16.xpose.msra.mxu0 0
        %1199 = vmatprep.subr.bf16.mxu0 0
        %1200 = vmatpush2.bf16.xpose.msra.mxu0 0
        %1201 = vmatprep.subr.bf16.mxu0 0
        %1202 = vmatpush2.bf16.xpose.msra.mxu0 0
        %1203 = vmatprep.subr.bf16.mxu0 0
        %1204 = vmatpush2.bf16.xpose.msra.mxu0 0
        %1205 = vmatprep.subr.bf16.mxu0 0
        %1206 = vmatpush2.bf16.xpose.msra.mxu0 0
        %1207 = vmatprep.subr.bf16.mxu0 0
        %1208 = vmatpush2.bf16.xpose.msra.mxu0 0
        %1209 = vmatprep.subr.bf16.mxu0 0
        %1210 = vmatpush2.bf16.xpose.msra.mxu0 0
        %1211 = vmatprep.mubr.bf16.mxu0 0
        %1212 = vmatmul.mubr.bf16.gmra.mxu0 %v970
        %v1213 = vpop.f32.mrf.mxu0
        %v1214 = vadd.f32 %v1159, %v1213
        %v1215 = vpop.f32.mrf.mxu0
        %v1216 = vpop.f32.mrf.mxu0
        %v1217 = vpop.f32.mrf.mxu0
        %1218 = vdwg.mxu0
        %v1220 = vsel %vm761, %v1145, 0
        %1222 = vmatprep.subr.bf16.mxu0 0
        %1223 = vmatpush1.bf16.xpose.msra.mxu0 0
        %1224 = vmatprep.subr.bf16.mxu0 0
        %1225 = vmatpush1.bf16.xpose.msra.mxu0 0
        %1226 = vmatprep.subr.bf16.mxu0 0
        %1227 = vmatpush1.bf16.xpose.msra.mxu0 0
        %1228 = vmatprep.subr.bf16.mxu0 0
        %1229 = vmatpush1.bf16.xpose.msra.mxu0 0
        %1230 = vmatprep.subr.bf16.mxu0 0
        %1231 = vmatpush1.bf16.xpose.msra.mxu0 0
        %1232 = vmatprep.subr.bf16.mxu0 0
        %1233 = vmatpush1.bf16.xpose.msra.mxu0 0
        %1234 = vmatprep.subr.bf16.mxu0 0
        %1235 = vmatpush1.bf16.xpose.msra.mxu0 0
        %1236 = vmatprep.subr.bf16.mxu0 0
        %1237 = vmatpush1.bf16.xpose.msra.mxu0 %v1220
        %1238 = vmatprep.subr.bf16.mxu0 0
        %1239 = vmatpush2.bf16.xpose.msra.mxu0 0
        %1240 = vmatprep.subr.bf16.mxu0 0
        %1241 = vmatpush2.bf16.xpose.msra.mxu0 0
        %1242 = vmatprep.subr.bf16.mxu0 0
        %1243 = vmatpush2.bf16.xpose.msra.mxu0 0
        %1244 = vmatprep.subr.bf16.mxu0 0
        %1245 = vmatpush2.bf16.xpose.msra.mxu0 0
        %1246 = vmatprep.subr.bf16.mxu0 0
        %1247 = vmatpush2.bf16.xpose.msra.mxu0 0
        %1248 = vmatprep.subr.bf16.mxu0 0
        %1249 = vmatpush2.bf16.xpose.msra.mxu0 0
        %1250 = vmatprep.subr.bf16.mxu0 0
        %1251 = vmatpush2.bf16.xpose.msra.mxu0 0
        %1252 = vmatprep.subr.bf16.mxu0 0
        %1253 = vmatpush2.bf16.xpose.msra.mxu0 0
        %1254 = vmatprep.mubr.bf16.mxu0 0
        %1255 = vmatmul.mubr.bf16.gmra.mxu0 %v970
        %v1256 = vpop.f32.mrf.mxu0
        %v1257 = vadd.f32 %v1163, %v1256
        %v1258 = vpop.f32.mrf.mxu0
        %v1259 = vpop.f32.mrf.mxu0
        %v1260 = vpop.f32.mrf.mxu0
        %1261 = vdwg.mxu0
        %v1263 = vsel %vm761, %v1146, 0
        %1265 = vmatprep.subr.bf16.mxu0 0
        %1266 = vmatpush1.bf16.xpose.msra.mxu0 0
        %1267 = vmatprep.subr.bf16.mxu0 0
        %1268 = vmatpush1.bf16.xpose.msra.mxu0 0
        %1269 = vmatprep.subr.bf16.mxu0 0
        %1270 = vmatpush1.bf16.xpose.msra.mxu0 0
        %1271 = vmatprep.subr.bf16.mxu0 0
        %1272 = vmatpush1.bf16.xpose.msra.mxu0 0
        %1273 = vmatprep.subr.bf16.mxu0 0
        %1274 = vmatpush1.bf16.xpose.msra.mxu0 0
        %1275 = vmatprep.subr.bf16.mxu0 0
        %1276 = vmatpush1.bf16.xpose.msra.mxu0 0
        %1277 = vmatprep.subr.bf16.mxu0 0
        %1278 = vmatpush1.bf16.xpose.msra.mxu0 0
        %1279 = vmatprep.subr.bf16.mxu0 0
        %1280 = vmatpush1.bf16.xpose.msra.mxu0 %v1263
        %1281 = vmatprep.subr.bf16.mxu0 0
        %1282 = vmatpush2.bf16.xpose.msra.mxu0 0
        %1283 = vmatprep.subr.bf16.mxu0 0
        %1284 = vmatpush2.bf16.xpose.msra.mxu0 0
        %1285 = vmatprep.subr.bf16.mxu0 0
        %1286 = vmatpush2.bf16.xpose.msra.mxu0 0
        %1287 = vmatprep.subr.bf16.mxu0 0
        %1288 = vmatpush2.bf16.xpose.msra.mxu0 0
        %1289 = vmatprep.subr.bf16.mxu0 0
        %1290 = vmatpush2.bf16.xpose.msra.mxu0 0
        %1291 = vmatprep.subr.bf16.mxu0 0
        %1292 = vmatpush2.bf16.xpose.msra.mxu0 0
        %1293 = vmatprep.subr.bf16.mxu0 0
        %1294 = vmatpush2.bf16.xpose.msra.mxu0 0
        %1295 = vmatprep.subr.bf16.mxu0 0
        %1296 = vmatpush2.bf16.xpose.msra.mxu0 0
        %1297 = vmatprep.mubr.bf16.mxu0 0
        %1298 = vmatmul.mubr.bf16.gmra.mxu0 %v970
        %v1299 = vpop.f32.mrf.mxu0
        %v1300 = vadd.f32 %v1167, %v1299
        %v1301 = vpop.f32.mrf.mxu0
        %v1302 = vpop.f32.mrf.mxu0
        %v1303 = vpop.f32.mrf.mxu0
        %1304 = vdwg.mxu0
        %v1306 = vsel %vm761, %v1147, 0
        %1308 = vmatprep.subr.bf16.mxu0 0
        %1309 = vmatpush1.bf16.xpose.msra.mxu0 0
        %1310 = vmatprep.subr.bf16.mxu0 0
        %1311 = vmatpush1.bf16.xpose.msra.mxu0 0
        %1312 = vmatprep.subr.bf16.mxu0 0
        %1313 = vmatpush1.bf16.xpose.msra.mxu0 0
        %1314 = vmatprep.subr.bf16.mxu0 0
        %1315 = vmatpush1.bf16.xpose.msra.mxu0 0
        %1316 = vmatprep.subr.bf16.mxu0 0
        %1317 = vmatpush1.bf16.xpose.msra.mxu0 0
        %1318 = vmatprep.subr.bf16.mxu0 0
        %1319 = vmatpush1.bf16.xpose.msra.mxu0 0
        %1320 = vmatprep.subr.bf16.mxu0 0
        %1321 = vmatpush1.bf16.xpose.msra.mxu0 0
        %1322 = vmatprep.subr.bf16.mxu0 0
        %1323 = vmatpush1.bf16.xpose.msra.mxu0 %v1306
        %1324 = vmatprep.subr.bf16.mxu0 0
        %1325 = vmatpush2.bf16.xpose.msra.mxu0 0
        %1326 = vmatprep.subr.bf16.mxu0 0
        %1327 = vmatpush2.bf16.xpose.msra.mxu0 0
        %1328 = vmatprep.subr.bf16.mxu0 0
        %1329 = vmatpush2.bf16.xpose.msra.mxu0 0
        %1330 = vmatprep.subr.bf16.mxu0 0
        %1331 = vmatpush2.bf16.xpose.msra.mxu0 0
        %1332 = vmatprep.subr.bf16.mxu0 0
        %1333 = vmatpush2.bf16.xpose.msra.mxu0 0
        %1334 = vmatprep.subr.bf16.mxu0 0
        %1335 = vmatpush2.bf16.xpose.msra.mxu0 0
        %1336 = vmatprep.subr.bf16.mxu0 0
        %1337 = vmatpush2.bf16.xpose.msra.mxu0 0
        %1338 = vmatprep.subr.bf16.mxu0 0
        %1339 = vmatpush2.bf16.xpose.msra.mxu0 0
        %1340 = vmatprep.mubr.bf16.mxu0 0
        %1341 = vmatmul.mubr.bf16.gmra.mxu0 %v970
        %v1342 = vpop.f32.mrf.mxu0
        %v1343 = vadd.f32 %v1171, %v1342
        %v1344 = vpop.f32.mrf.mxu0
        %v1345 = vpop.f32.mrf.mxu0
        %v1346 = vpop.f32.mrf.mxu0
        %1347 = vdwg.mxu0
        %v1348 = vpack.c.bf16 %v803, %v803
        %v1349 = vpack.c.bf16 %v846, %v846
        %v1350 = vpack.c.bf16 %v889, %v889
        %v1351 = vpack.c.bf16 %v932, %v932
        %v1352 = vpack.c.bf16 %v1010, %v1010
        %v1353 = vpack.c.bf16 %v1053, %v1053
        %v1354 = vpack.c.bf16 %v1096, %v1096
        %v1355 = vpack.c.bf16 %v1139, %v1139
        %vm1356 = vcmask 64512
        %v1358 = vsel %vm1356, %v1348, 0
        %v1361 = vsel %vm1356, %v1352, 0
        %1363 = vmatprep.subr.bf16.mxu0 0
        %1364 = vmatpush1.bf16.xpose.msra.mxu0 0
        %1365 = vmatprep.subr.bf16.mxu0 0
        %1366 = vmatpush1.bf16.xpose.msra.mxu0 0
        %1367 = vmatprep.subr.bf16.mxu0 0
        %1368 = vmatpush1.bf16.xpose.msra.mxu0 0
        %1369 = vmatprep.subr.bf16.mxu0 0
        %1370 = vmatpush1.bf16.xpose.msra.mxu0 0
        %1371 = vmatprep.subr.bf16.mxu0 0
        %1372 = vmatpush1.bf16.xpose.msra.mxu0 0
        %1373 = vmatprep.subr.bf16.mxu0 0
        %1374 = vmatpush1.bf16.xpose.msra.mxu0 0
        %1375 = vmatprep.subr.bf16.mxu0 0
        %1376 = vmatpush1.bf16.xpose.msra.mxu0 0
        %1377 = vmatprep.subr.bf16.mxu0 0
        %1378 = vmatpush1.bf16.xpose.msra.mxu0 %v1361
        %1379 = vmatprep.subr.bf16.mxu0 0
        %1380 = vmatpush2.bf16.xpose.msra.mxu0 0
        %1381 = vmatprep.subr.bf16.mxu0 0
        %1382 = vmatpush2.bf16.xpose.msra.mxu0 0
        %1383 = vmatprep.subr.bf16.mxu0 0
        %1384 = vmatpush2.bf16.xpose.msra.mxu0 0
        %1385 = vmatprep.subr.bf16.mxu0 0
        %1386 = vmatpush2.bf16.xpose.msra.mxu0 0
        %1387 = vmatprep.subr.bf16.mxu0 0
        %1388 = vmatpush2.bf16.xpose.msra.mxu0 0
        %1389 = vmatprep.subr.bf16.mxu0 0
        %1390 = vmatpush2.bf16.xpose.msra.mxu0 0
        %1391 = vmatprep.subr.bf16.mxu0 0
        %1392 = vmatpush2.bf16.xpose.msra.mxu0 0
        %1393 = vmatprep.subr.bf16.mxu0 0
        %1394 = vmatpush2.bf16.xpose.msra.mxu0 0
        %1395 = vmatprep.mubr.bf16.mxu0 0
        %1396 = vmatmul.mubr.bf16.gmra.mxu0 %v1358
        %v1397 = vpop.f32.mrf.mxu0
        %v1398 = vadd.f32 0.0, %v1397
        %v1399 = vpop.f32.mrf.mxu0
        %v1400 = vpop.f32.mrf.mxu0
        %v1401 = vpop.f32.mrf.mxu0
        %1402 = vdwg.mxu0
        %v1404 = vsel %vm1356, %v1349, 0
        %v1407 = vsel %vm1356, %v1353, 0
        %1409 = vmatprep.subr.bf16.mxu0 0
        %1410 = vmatpush1.bf16.xpose.msra.mxu0 0
        %1411 = vmatprep.subr.bf16.mxu0 0
        %1412 = vmatpush1.bf16.xpose.msra.mxu0 0
        %1413 = vmatprep.subr.bf16.mxu0 0
        %1414 = vmatpush1.bf16.xpose.msra.mxu0 0
        %1415 = vmatprep.subr.bf16.mxu0 0
        %1416 = vmatpush1.bf16.xpose.msra.mxu0 0
        %1417 = vmatprep.subr.bf16.mxu0 0
        %1418 = vmatpush1.bf16.xpose.msra.mxu0 0
        %1419 = vmatprep.subr.bf16.mxu0 0
        %1420 = vmatpush1.bf16.xpose.msra.mxu0 0
        %1421 = vmatprep.subr.bf16.mxu0 0
        %1422 = vmatpush1.bf16.xpose.msra.mxu0 0
        %1423 = vmatprep.subr.bf16.mxu0 0
        %1424 = vmatpush1.bf16.xpose.msra.mxu0 %v1407
        %1425 = vmatprep.subr.bf16.mxu0 0
        %1426 = vmatpush2.bf16.xpose.msra.mxu0 0
        %1427 = vmatprep.subr.bf16.mxu0 0
        %1428 = vmatpush2.bf16.xpose.msra.mxu0 0
        %1429 = vmatprep.subr.bf16.mxu0 0
        %1430 = vmatpush2.bf16.xpose.msra.mxu0 0
        %1431 = vmatprep.subr.bf16.mxu0 0
        %1432 = vmatpush2.bf16.xpose.msra.mxu0 0
        %1433 = vmatprep.subr.bf16.mxu0 0
        %1434 = vmatpush2.bf16.xpose.msra.mxu0 0
        %1435 = vmatprep.subr.bf16.mxu0 0
        %1436 = vmatpush2.bf16.xpose.msra.mxu0 0
        %1437 = vmatprep.subr.bf16.mxu0 0
        %1438 = vmatpush2.bf16.xpose.msra.mxu0 0
        %1439 = vmatprep.subr.bf16.mxu0 0
        %1440 = vmatpush2.bf16.xpose.msra.mxu0 0
        %1441 = vmatprep.mubr.bf16.mxu0 0
        %1442 = vmatmul.mubr.bf16.gmra.mxu0 %v1404
        %v1443 = vpop.f32.mrf.mxu0
        %v1444 = vadd.f32 0.0, %v1443
        %v1445 = vpop.f32.mrf.mxu0
        %v1446 = vpop.f32.mrf.mxu0
        %v1447 = vpop.f32.mrf.mxu0
        %1448 = vdwg.mxu0
        %v1450 = vsel %vm1356, %v1350, 0
        %v1453 = vsel %vm1356, %v1354, 0
        %1455 = vmatprep.subr.bf16.mxu0 0
        %1456 = vmatpush1.bf16.xpose.msra.mxu0 0
        %1457 = vmatprep.subr.bf16.mxu0 0
        %1458 = vmatpush1.bf16.xpose.msra.mxu0 0
        %1459 = vmatprep.subr.bf16.mxu0 0
        %1460 = vmatpush1.bf16.xpose.msra.mxu0 0
        %1461 = vmatprep.subr.bf16.mxu0 0
        %1462 = vmatpush1.bf16.xpose.msra.mxu0 0
        %1463 = vmatprep.subr.bf16.mxu0 0
        %1464 = vmatpush1.bf16.xpose.msra.mxu0 0
        %1465 = vmatprep.subr.bf16.mxu0 0
        %1466 = vmatpush1.bf16.xpose.msra.mxu0 0
        %1467 = vmatprep.subr.bf16.mxu0 0
        %1468 = vmatpush1.bf16.xpose.msra.mxu0 0
        %1469 = vmatprep.subr.bf16.mxu0 0
        %1470 = vmatpush1.bf16.xpose.msra.mxu0 %v1453
        %1471 = vmatprep.subr.bf16.mxu0 0
        %1472 = vmatpush2.bf16.xpose.msra.mxu0 0
        %1473 = vmatprep.subr.bf16.mxu0 0
        %1474 = vmatpush2.bf16.xpose.msra.mxu0 0
        %1475 = vmatprep.subr.bf16.mxu0 0
        %1476 = vmatpush2.bf16.xpose.msra.mxu0 0
        %1477 = vmatprep.subr.bf16.mxu0 0
        %1478 = vmatpush2.bf16.xpose.msra.mxu0 0
        %1479 = vmatprep.subr.bf16.mxu0 0
        %1480 = vmatpush2.bf16.xpose.msra.mxu0 0
        %1481 = vmatprep.subr.bf16.mxu0 0
        %1482 = vmatpush2.bf16.xpose.msra.mxu0 0
        %1483 = vmatprep.subr.bf16.mxu0 0
        %1484 = vmatpush2.bf16.xpose.msra.mxu0 0
        %1485 = vmatprep.subr.bf16.mxu0 0
        %1486 = vmatpush2.bf16.xpose.msra.mxu0 0
        %1487 = vmatprep.mubr.bf16.mxu0 0
        %1488 = vmatmul.mubr.bf16.gmra.mxu0 %v1450
        %v1489 = vpop.f32.mrf.mxu0
        %v1490 = vadd.f32 0.0, %v1489
        %v1491 = vpop.f32.mrf.mxu0
        %v1492 = vpop.f32.mrf.mxu0
        %v1493 = vpop.f32.mrf.mxu0
        %1494 = vdwg.mxu0
        %v1496 = vsel %vm1356, %v1351, 0
        %v1499 = vsel %vm1356, %v1355, 0
        %1501 = vmatprep.subr.bf16.mxu0 0
        %1502 = vmatpush1.bf16.xpose.msra.mxu0 0
        %1503 = vmatprep.subr.bf16.mxu0 0
        %1504 = vmatpush1.bf16.xpose.msra.mxu0 0
        %1505 = vmatprep.subr.bf16.mxu0 0
        %1506 = vmatpush1.bf16.xpose.msra.mxu0 0
        %1507 = vmatprep.subr.bf16.mxu0 0
        %1508 = vmatpush1.bf16.xpose.msra.mxu0 0
        %1509 = vmatprep.subr.bf16.mxu0 0
        %1510 = vmatpush1.bf16.xpose.msra.mxu0 0
        %1511 = vmatprep.subr.bf16.mxu0 0
        %1512 = vmatpush1.bf16.xpose.msra.mxu0 0
        %1513 = vmatprep.subr.bf16.mxu0 0
        %1514 = vmatpush1.bf16.xpose.msra.mxu0 0
        %1515 = vmatprep.subr.bf16.mxu0 0
        %1516 = vmatpush1.bf16.xpose.msra.mxu0 %v1499
        %1517 = vmatprep.subr.bf16.mxu0 0
        %1518 = vmatpush2.bf16.xpose.msra.mxu0 0
        %1519 = vmatprep.subr.bf16.mxu0 0
        %1520 = vmatpush2.bf16.xpose.msra.mxu0 0
        %1521 = vmatprep.subr.bf16.mxu0 0
        %1522 = vmatpush2.bf16.xpose.msra.mxu0 0
        %1523 = vmatprep.subr.bf16.mxu0 0
        %1524 = vmatpush2.bf16.xpose.msra.mxu0 0
        %1525 = vmatprep.subr.bf16.mxu0 0
        %1526 = vmatpush2.bf16.xpose.msra.mxu0 0
        %1527 = vmatprep.subr.bf16.mxu0 0
        %1528 = vmatpush2.bf16.xpose.msra.mxu0 0
        %1529 = vmatprep.subr.bf16.mxu0 0
        %1530 = vmatpush2.bf16.xpose.msra.mxu0 0
        %1531 = vmatprep.subr.bf16.mxu0 0
        %1532 = vmatpush2.bf16.xpose.msra.mxu0 0
        %1533 = vmatprep.mubr.bf16.mxu0 0
        %1534 = vmatmul.mubr.bf16.gmra.mxu0 %v1496
        %v1535 = vpop.f32.mrf.mxu0
        %v1536 = vadd.f32 0.0, %v1535
        %v1537 = vpop.f32.mrf.mxu0
        %v1538 = vpop.f32.mrf.mxu0
        %v1539 = vpop.f32.mrf.mxu0
        %1540 = vdwg.mxu0
        %v1541 = vmul.f32 %v1398, 0.35355338
        %v1542 = vmul.f32 %v1444, 0.35355338
        %v1543 = vmul.f32 %v1490, 0.35355338
        %v1544 = vmul.f32 %v1536, 0.35355338
        %v1545 = vsel %vm1356, %v1541, -inf
        %1546 = vmax.xlane.f32.xlu0 %v1545
        %v1547 = vpop.xlane.xlu0 %1546
        %v1548 = vsel %vm1356, %v1542, -inf
        %1549 = vmax.xlane.f32.xlu0 %v1548
        %v1550 = vpop.xlane.xlu0 %1549
        %v1551 = vsel %vm1356, %v1543, -inf
        %1552 = vmax.xlane.f32.xlu0 %v1551
        %v1553 = vpop.xlane.xlu0 %1552
        %v1554 = vsel %vm1356, %v1544, -inf
        %1555 = vmax.xlane.f32.xlu0 %v1554
        %v1556 = vpop.xlane.xlu0 %1555
        %v1557 = vsub.f32 %v1541, %v1547
        %v1558 = vsub.f32 %v1542, %v1550
        %v1559 = vsub.f32 %v1543, %v1553
        %v1560 = vsub.f32 %v1544, %v1556
        %v1561 = vmul.f32 %v1557, 1.442695
        %v1562 = vpow.pop %v1561
        %v1563 = vmul.f32 %v1558, 1.442695
        %v1564 = vpow.pop %v1563
        %v1565 = vmul.f32 %v1559, 1.442695
        %v1566 = vpow.pop %v1565
        %v1567 = vmul.f32 %v1560, 1.442695
        %v1568 = vpow.pop %v1567
        %v1569 = vsel %vm1356, %v1562, 0.0
        %1570 = vadd.xlane.f32.xlu0 %v1569
        %v1571 = vpop.xlane.xlu0 %1570
        %v1572 = vsel %vm1356, %v1564, 0.0
        %1573 = vadd.xlane.f32.xlu0 %v1572
        %v1574 = vpop.xlane.xlu0 %1573
        %v1575 = vsel %vm1356, %v1566, 0.0
        %1576 = vadd.xlane.f32.xlu0 %v1575
        %v1577 = vpop.xlane.xlu0 %1576
        %v1578 = vsel %vm1356, %v1568, 0.0
        %1579 = vadd.xlane.f32.xlu0 %v1578
        %v1580 = vpop.xlane.xlu0 %1579
        %v1581 = vrcp.pop %v1571
        %v1582 = vrcp.pop %v1574
        %v1583 = vrcp.pop %v1577
        %v1584 = vrcp.pop %v1580
        %v1585 = vmul.f32 %v1562, %v1581
        %v1586 = vmul.f32 %v1564, %v1582
        %v1587 = vmul.f32 %v1566, %v1583
        %v1588 = vmul.f32 %v1568, %v1584
        %v1589 = vpack.c.bf16 %v1585, %v1585
        %v1590 = vpack.c.bf16 %v1586, %v1586
        %v1591 = vpack.c.bf16 %v1587, %v1587
        %v1592 = vpack.c.bf16 %v1588, %v1588
        %v1593 = vpack.c.bf16 %v1214, %v1214
        %v1594 = vpack.c.bf16 %v1257, %v1257
        %v1595 = vpack.c.bf16 %v1300, %v1300
        %v1596 = vpack.c.bf16 %v1343, %v1343
        %v1598 = vsel %vm1356, %v1589, 0
        %vm1600 = vcmask 1043456
        %v1602 = vsel %vm1600, %v1593, 0
        %1604 = vmatprep.subr.bf16.mxu0 0
        %1605 = vmatpush1.bf16.msra.mxu0 0
        %1606 = vmatprep.subr.bf16.mxu0 0
        %1607 = vmatpush1.bf16.msra.mxu0 0
        %1608 = vmatprep.subr.bf16.mxu0 0
        %1609 = vmatpush1.bf16.msra.mxu0 0
        %1610 = vmatprep.subr.bf16.mxu0 0
        %1611 = vmatpush1.bf16.msra.mxu0 0
        %1612 = vmatprep.subr.bf16.mxu0 0
        %1613 = vmatpush1.bf16.msra.mxu0 0
        %1614 = vmatprep.subr.bf16.mxu0 0
        %1615 = vmatpush1.bf16.msra.mxu0 0
        %1616 = vmatprep.subr.bf16.mxu0 0
        %1617 = vmatpush1.bf16.msra.mxu0 0
        %1618 = vmatprep.subr.bf16.mxu0 0
        %1619 = vmatpush1.bf16.msra.mxu0 %v1602
        %1620 = vmatprep.subr.bf16.mxu0 0
        %1621 = vmatpush2.bf16.msra.mxu0 0
        %1622 = vmatprep.subr.bf16.mxu0 0
        %1623 = vmatpush2.bf16.msra.mxu0 0
        %1624 = vmatprep.subr.bf16.mxu0 0
        %1625 = vmatpush2.bf16.msra.mxu0 0
        %1626 = vmatprep.subr.bf16.mxu0 0
        %1627 = vmatpush2.bf16.msra.mxu0 0
        %1628 = vmatprep.subr.bf16.mxu0 0
        %1629 = vmatpush2.bf16.msra.mxu0 0
        %1630 = vmatprep.subr.bf16.mxu0 0
        %1631 = vmatpush2.bf16.msra.mxu0 0
        %1632 = vmatprep.subr.bf16.mxu0 0
        %1633 = vmatpush2.bf16.msra.mxu0 0
        %1634 = vmatprep.subr.bf16.mxu0 0
        %1635 = vmatpush2.bf16.msra.mxu0 0
        %1636 = vmatprep.mubr.bf16.mxu0 0
        %1637 = vmatmul.mubr.bf16.gmra.mxu0 %v1598
        %v1638 = vpop.f32.mrf.mxu0
        %v1639 = vadd.f32 0.0, %v1638
        %v1640 = vpop.f32.mrf.mxu0
        %v1641 = vpop.f32.mrf.mxu0
        %v1642 = vpop.f32.mrf.mxu0
        %1643 = vdwg.mxu0
        %v1645 = vsel %vm1356, %v1590, 0
        %v1648 = vsel %vm1600, %v1594, 0
        %1650 = vmatprep.subr.bf16.mxu0 0
        %1651 = vmatpush1.bf16.msra.mxu0 0
        %1652 = vmatprep.subr.bf16.mxu0 0
        %1653 = vmatpush1.bf16.msra.mxu0 0
        %1654 = vmatprep.subr.bf16.mxu0 0
        %1655 = vmatpush1.bf16.msra.mxu0 0
        %1656 = vmatprep.subr.bf16.mxu0 0
        %1657 = vmatpush1.bf16.msra.mxu0 0
        %1658 = vmatprep.subr.bf16.mxu0 0
        %1659 = vmatpush1.bf16.msra.mxu0 0
        %1660 = vmatprep.subr.bf16.mxu0 0
        %1661 = vmatpush1.bf16.msra.mxu0 0
        %1662 = vmatprep.subr.bf16.mxu0 0
        %1663 = vmatpush1.bf16.msra.mxu0 0
        %1664 = vmatprep.subr.bf16.mxu0 0
        %1665 = vmatpush1.bf16.msra.mxu0 %v1648
        %1666 = vmatprep.subr.bf16.mxu0 0
        %1667 = vmatpush2.bf16.msra.mxu0 0
        %1668 = vmatprep.subr.bf16.mxu0 0
        %1669 = vmatpush2.bf16.msra.mxu0 0
        %1670 = vmatprep.subr.bf16.mxu0 0
        %1671 = vmatpush2.bf16.msra.mxu0 0
        %1672 = vmatprep.subr.bf16.mxu0 0
        %1673 = vmatpush2.bf16.msra.mxu0 0
        %1674 = vmatprep.subr.bf16.mxu0 0
        %1675 = vmatpush2.bf16.msra.mxu0 0
        %1676 = vmatprep.subr.bf16.mxu0 0
        %1677 = vmatpush2.bf16.msra.mxu0 0
        %1678 = vmatprep.subr.bf16.mxu0 0
        %1679 = vmatpush2.bf16.msra.mxu0 0
        %1680 = vmatprep.subr.bf16.mxu0 0
        %1681 = vmatpush2.bf16.msra.mxu0 0
        %1682 = vmatprep.mubr.bf16.mxu0 0
        %1683 = vmatmul.mubr.bf16.gmra.mxu0 %v1645
        %v1684 = vpop.f32.mrf.mxu0
        %v1685 = vadd.f32 0.0, %v1684
        %v1686 = vpop.f32.mrf.mxu0
        %v1687 = vpop.f32.mrf.mxu0
        %v1688 = vpop.f32.mrf.mxu0
        %1689 = vdwg.mxu0
        %v1691 = vsel %vm1356, %v1591, 0
        %v1694 = vsel %vm1600, %v1595, 0
        %1696 = vmatprep.subr.bf16.mxu0 0
        %1697 = vmatpush1.bf16.msra.mxu0 0
        %1698 = vmatprep.subr.bf16.mxu0 0
        %1699 = vmatpush1.bf16.msra.mxu0 0
        %1700 = vmatprep.subr.bf16.mxu0 0
        %1701 = vmatpush1.bf16.msra.mxu0 0
        %1702 = vmatprep.subr.bf16.mxu0 0
        %1703 = vmatpush1.bf16.msra.mxu0 0
        %1704 = vmatprep.subr.bf16.mxu0 0
        %1705 = vmatpush1.bf16.msra.mxu0 0
        %1706 = vmatprep.subr.bf16.mxu0 0
        %1707 = vmatpush1.bf16.msra.mxu0 0
        %1708 = vmatprep.subr.bf16.mxu0 0
        %1709 = vmatpush1.bf16.msra.mxu0 0
        %1710 = vmatprep.subr.bf16.mxu0 0
        %1711 = vmatpush1.bf16.msra.mxu0 %v1694
        %1712 = vmatprep.subr.bf16.mxu0 0
        %1713 = vmatpush2.bf16.msra.mxu0 0
        %1714 = vmatprep.subr.bf16.mxu0 0
        %1715 = vmatpush2.bf16.msra.mxu0 0
        %1716 = vmatprep.subr.bf16.mxu0 0
        %1717 = vmatpush2.bf16.msra.mxu0 0
        %1718 = vmatprep.subr.bf16.mxu0 0
        %1719 = vmatpush2.bf16.msra.mxu0 0
        %1720 = vmatprep.subr.bf16.mxu0 0
        %1721 = vmatpush2.bf16.msra.mxu0 0
        %1722 = vmatprep.subr.bf16.mxu0 0
        %1723 = vmatpush2.bf16.msra.mxu0 0
        %1724 = vmatprep.subr.bf16.mxu0 0
        %1725 = vmatpush2.bf16.msra.mxu0 0
        %1726 = vmatprep.subr.bf16.mxu0 0
        %1727 = vmatpush2.bf16.msra.mxu0 0
        %1728 = vmatprep.mubr.bf16.mxu0 0
        %1729 = vmatmul.mubr.bf16.gmra.mxu0 %v1691
        %v1730 = vpop.f32.mrf.mxu0
        %v1731 = vadd.f32 0.0, %v1730
        %v1732 = vpop.f32.mrf.mxu0
        %v1733 = vpop.f32.mrf.mxu0
        %v1734 = vpop.f32.mrf.mxu0
        %1735 = vdwg.mxu0
        %v1737 = vsel %vm1356, %v1592, 0
        %v1740 = vsel %vm1600, %v1596, 0
        %1742 = vmatprep.subr.bf16.mxu0 0
        %1743 = vmatpush1.bf16.msra.mxu0 0
        %1744 = vmatprep.subr.bf16.mxu0 0
        %1745 = vmatpush1.bf16.msra.mxu0 0
        %1746 = vmatprep.subr.bf16.mxu0 0
        %1747 = vmatpush1.bf16.msra.mxu0 0
        %1748 = vmatprep.subr.bf16.mxu0 0
        %1749 = vmatpush1.bf16.msra.mxu0 0
        %1750 = vmatprep.subr.bf16.mxu0 0
        %1751 = vmatpush1.bf16.msra.mxu0 0
        %1752 = vmatprep.subr.bf16.mxu0 0
        %1753 = vmatpush1.bf16.msra.mxu0 0
        %1754 = vmatprep.subr.bf16.mxu0 0
        %1755 = vmatpush1.bf16.msra.mxu0 0
        %1756 = vmatprep.subr.bf16.mxu0 0
        %1757 = vmatpush1.bf16.msra.mxu0 %v1740
        %1758 = vmatprep.subr.bf16.mxu0 0
        %1759 = vmatpush2.bf16.msra.mxu0 0
        %1760 = vmatprep.subr.bf16.mxu0 0
        %1761 = vmatpush2.bf16.msra.mxu0 0
        %1762 = vmatprep.subr.bf16.mxu0 0
        %1763 = vmatpush2.bf16.msra.mxu0 0
        %1764 = vmatprep.subr.bf16.mxu0 0
        %1765 = vmatpush2.bf16.msra.mxu0 0
        %1766 = vmatprep.subr.bf16.mxu0 0
        %1767 = vmatpush2.bf16.msra.mxu0 0
        %1768 = vmatprep.subr.bf16.mxu0 0
        %1769 = vmatpush2.bf16.msra.mxu0 0
        %1770 = vmatprep.subr.bf16.mxu0 0
        %1771 = vmatpush2.bf16.msra.mxu0 0
        %1772 = vmatprep.subr.bf16.mxu0 0
        %1773 = vmatpush2.bf16.msra.mxu0 0
        %1774 = vmatprep.mubr.bf16.mxu0 0
        %1775 = vmatmul.mubr.bf16.gmra.mxu0 %v1737
        %v1776 = vpop.f32.mrf.mxu0
        %v1777 = vadd.f32 0.0, %v1776
        %v1778 = vpop.f32.mrf.mxu0
        %v1779 = vpop.f32.mrf.mxu0
        %v1780 = vpop.f32.mrf.mxu0
        %1781 = vdwg.mxu0
        %v1782 = vpack.c.bf16 %v1639, %v1639
        %v1783 = vpack.c.bf16 %v1685, %v1685
        %v1784 = vpack.c.bf16 %v1731, %v1731
        %v1785 = vpack.c.bf16 %v1777, %v1777
        %v1786 = vld [vmem:[#allocation8] sm:$0xf]
        %v1787 = vld [vmem:[#allocation8 + $0x4] sm:$0xf]
        %v1788 = vld [vmem:[#allocation8 + $0x8] sm:$0xf]
        %v1789 = vld [vmem:[#allocation8 + $0xc] sm:$0xf]
        %v1791 = vsel %vm1356, %v1782, 0
        %v1794 = vsel %vm1600, %v1786, 0
        %1796 = vmatprep.subr.bf16.mxu0 0
        %1797 = vmatpush1.bf16.msra.mxu0 0
        %1798 = vmatprep.subr.bf16.mxu0 0
        %1799 = vmatpush1.bf16.msra.mxu0 0
        %1800 = vmatprep.subr.bf16.mxu0 0
        %1801 = vmatpush1.bf16.msra.mxu0 0
        %1802 = vmatprep.subr.bf16.mxu0 0
        %1803 = vmatpush1.bf16.msra.mxu0 0
        %1804 = vmatprep.subr.bf16.mxu0 0
        %1805 = vmatpush1.bf16.msra.mxu0 0
        %1806 = vmatprep.subr.bf16.mxu0 0
        %1807 = vmatpush1.bf16.msra.mxu0 0
        %1808 = vmatprep.subr.bf16.mxu0 0
        %1809 = vmatpush1.bf16.msra.mxu0 0
        %1810 = vmatprep.subr.bf16.mxu0 0
        %1811 = vmatpush1.bf16.msra.mxu0 %v1794
        %1812 = vmatprep.subr.bf16.mxu0 0
        %1813 = vmatpush2.bf16.msra.mxu0 0
        %1814 = vmatprep.subr.bf16.mxu0 0
        %1815 = vmatpush2.bf16.msra.mxu0 0
        %1816 = vmatprep.subr.bf16.mxu0 0
        %1817 = vmatpush2.bf16.msra.mxu0 0
        %1818 = vmatprep.subr.bf16.mxu0 0
        %1819 = vmatpush2.bf16.msra.mxu0 0
        %1820 = vmatprep.subr.bf16.mxu0 0
        %1821 = vmatpush2.bf16.msra.mxu0 0
        %1822 = vmatprep.subr.bf16.mxu0 0
        %1823 = vmatpush2.bf16.msra.mxu0 0
        %1824 = vmatprep.subr.bf16.mxu0 0
        %1825 = vmatpush2.bf16.msra.mxu0 0
        %1826 = vmatprep.subr.bf16.mxu0 0
        %1827 = vmatpush2.bf16.msra.mxu0 0
        %1828 = vmatprep.mubr.bf16.mxu0 0
        %1829 = vmatmul.mubr.bf16.gmra.mxu0 %v1791
        %v1830 = vpop.f32.mrf.mxu0
        %v1831 = vadd.f32 0.0, %v1830
        %v1832 = vpop.f32.mrf.mxu0
        %v1833 = vpop.f32.mrf.mxu0
        %v1834 = vpop.f32.mrf.mxu0
        %1835 = vdwg.mxu0
        %v1837 = vsel %vm1356, %v1783, 0
        %v1840 = vsel %vm1600, %v1787, 0
        %1842 = vmatprep.subr.bf16.mxu0 0
        %1843 = vmatpush1.bf16.msra.mxu0 0
        %1844 = vmatprep.subr.bf16.mxu0 0
        %1845 = vmatpush1.bf16.msra.mxu0 0
        %1846 = vmatprep.subr.bf16.mxu0 0
        %1847 = vmatpush1.bf16.msra.mxu0 0
        %1848 = vmatprep.subr.bf16.mxu0 0
        %1849 = vmatpush1.bf16.msra.mxu0 0
        %1850 = vmatprep.subr.bf16.mxu0 0
        %1851 = vmatpush1.bf16.msra.mxu0 0
        %1852 = vmatprep.subr.bf16.mxu0 0
        %1853 = vmatpush1.bf16.msra.mxu0 0
        %1854 = vmatprep.subr.bf16.mxu0 0
        %1855 = vmatpush1.bf16.msra.mxu0 0
        %1856 = vmatprep.subr.bf16.mxu0 0
        %1857 = vmatpush1.bf16.msra.mxu0 %v1840
        %1858 = vmatprep.subr.bf16.mxu0 0
        %1859 = vmatpush2.bf16.msra.mxu0 0
        %1860 = vmatprep.subr.bf16.mxu0 0
        %1861 = vmatpush2.bf16.msra.mxu0 0
        %1862 = vmatprep.subr.bf16.mxu0 0
        %1863 = vmatpush2.bf16.msra.mxu0 0
        %1864 = vmatprep.subr.bf16.mxu0 0
        %1865 = vmatpush2.bf16.msra.mxu0 0
        %1866 = vmatprep.subr.bf16.mxu0 0
        %1867 = vmatpush2.bf16.msra.mxu0 0
        %1868 = vmatprep.subr.bf16.mxu0 0
        %1869 = vmatpush2.bf16.msra.mxu0 0
        %1870 = vmatprep.subr.bf16.mxu0 0
        %1871 = vmatpush2.bf16.msra.mxu0 0
        %1872 = vmatprep.subr.bf16.mxu0 0
        %1873 = vmatpush2.bf16.msra.mxu0 0
        %1874 = vmatprep.mubr.bf16.mxu0 0
        %1875 = vmatmul.mubr.bf16.gmra.mxu0 %v1837
        %v1876 = vpop.f32.mrf.mxu0
        %v1877 = vadd.f32 0.0, %v1876
        %v1878 = vpop.f32.mrf.mxu0
        %v1879 = vpop.f32.mrf.mxu0
        %v1880 = vpop.f32.mrf.mxu0
        %1881 = vdwg.mxu0
        %v1883 = vsel %vm1356, %v1784, 0
        %v1886 = vsel %vm1600, %v1788, 0
        %1888 = vmatprep.subr.bf16.mxu0 0
        %1889 = vmatpush1.bf16.msra.mxu0 0
        %1890 = vmatprep.subr.bf16.mxu0 0
        %1891 = vmatpush1.bf16.msra.mxu0 0
        %1892 = vmatprep.subr.bf16.mxu0 0
        %1893 = vmatpush1.bf16.msra.mxu0 0
        %1894 = vmatprep.subr.bf16.mxu0 0
        %1895 = vmatpush1.bf16.msra.mxu0 0
        %1896 = vmatprep.subr.bf16.mxu0 0
        %1897 = vmatpush1.bf16.msra.mxu0 0
        %1898 = vmatprep.subr.bf16.mxu0 0
        %1899 = vmatpush1.bf16.msra.mxu0 0
        %1900 = vmatprep.subr.bf16.mxu0 0
        %1901 = vmatpush1.bf16.msra.mxu0 0
        %1902 = vmatprep.subr.bf16.mxu0 0
        %1903 = vmatpush1.bf16.msra.mxu0 %v1886
        %1904 = vmatprep.subr.bf16.mxu0 0
        %1905 = vmatpush2.bf16.msra.mxu0 0
        %1906 = vmatprep.subr.bf16.mxu0 0
        %1907 = vmatpush2.bf16.msra.mxu0 0
        %1908 = vmatprep.subr.bf16.mxu0 0
        %1909 = vmatpush2.bf16.msra.mxu0 0
        %1910 = vmatprep.subr.bf16.mxu0 0
        %1911 = vmatpush2.bf16.msra.mxu0 0
        %1912 = vmatprep.subr.bf16.mxu0 0
        %1913 = vmatpush2.bf16.msra.mxu0 0
        %1914 = vmatprep.subr.bf16.mxu0 0
        %1915 = vmatpush2.bf16.msra.mxu0 0
        %1916 = vmatprep.subr.bf16.mxu0 0
        %1917 = vmatpush2.bf16.msra.mxu0 0
        %1918 = vmatprep.subr.bf16.mxu0 0
        %1919 = vmatpush2.bf16.msra.mxu0 0
        %1920 = vmatprep.mubr.bf16.mxu0 0
        %1921 = vmatmul.mubr.bf16.gmra.mxu0 %v1883
        %v1922 = vpop.f32.mrf.mxu0
        %v1923 = vadd.f32 0.0, %v1922
        %v1924 = vpop.f32.mrf.mxu0
        %v1925 = vpop.f32.mrf.mxu0
        %v1926 = vpop.f32.mrf.mxu0
        %1927 = vdwg.mxu0
        %v1929 = vsel %vm1356, %v1785, 0
        %v1932 = vsel %vm1600, %v1789, 0
        %1934 = vmatprep.subr.bf16.mxu0 0
        %1935 = vmatpush1.bf16.msra.mxu0 0
        %1936 = vmatprep.subr.bf16.mxu0 0
        %1937 = vmatpush1.bf16.msra.mxu0 0
        %1938 = vmatprep.subr.bf16.mxu0 0
        %1939 = vmatpush1.bf16.msra.mxu0 0
        %1940 = vmatprep.subr.bf16.mxu0 0
        %1941 = vmatpush1.bf16.msra.mxu0 0
        %1942 = vmatprep.subr.bf16.mxu0 0
        %1943 = vmatpush1.bf16.msra.mxu0 0
        %1944 = vmatprep.subr.bf16.mxu0 0
        %1945 = vmatpush1.bf16.msra.mxu0 0
        %1946 = vmatprep.subr.bf16.mxu0 0
        %1947 = vmatpush1.bf16.msra.mxu0 0
        %1948 = vmatprep.subr.bf16.mxu0 0
        %1949 = vmatpush1.bf16.msra.mxu0 %v1932
        %1950 = vmatprep.subr.bf16.mxu0 0
        %1951 = vmatpush2.bf16.msra.mxu0 0
        %1952 = vmatprep.subr.bf16.mxu0 0
        %1953 = vmatpush2.bf16.msra.mxu0 0
        %1954 = vmatprep.subr.bf16.mxu0 0
        %1955 = vmatpush2.bf16.msra.mxu0 0
        %1956 = vmatprep.subr.bf16.mxu0 0
        %1957 = vmatpush2.bf16.msra.mxu0 0
        %1958 = vmatprep.subr.bf16.mxu0 0
        %1959 = vmatpush2.bf16.msra.mxu0 0
        %1960 = vmatprep.subr.bf16.mxu0 0
        %1961 = vmatpush2.bf16.msra.mxu0 0
        %1962 = vmatprep.subr.bf16.mxu0 0
        %1963 = vmatpush2.bf16.msra.mxu0 0
        %1964 = vmatprep.subr.bf16.mxu0 0
        %1965 = vmatpush2.bf16.msra.mxu0 0
        %1966 = vmatprep.mubr.bf16.mxu0 0
        %1967 = vmatmul.mubr.bf16.gmra.mxu0 %v1929
        %v1968 = vpop.f32.mrf.mxu0
        %v1969 = vadd.f32 0.0, %v1968
        %v1970 = vpop.f32.mrf.mxu0
        %v1971 = vpop.f32.mrf.mxu0
        %v1972 = vpop.f32.mrf.mxu0
        %1973 = vdwg.mxu0
        %v1974 = vsel %vm761, %v1831, 0.0
        %v1975 = vsel %vm761, %v1877, 0.0
        %v1976 = vadd.f32 %v1974, %v1975
        %v1977 = vsel %vm761, %v1923, 0.0
        %v1978 = vadd.f32 %v1976, %v1977
        %v1979 = vsel %vm761, %v1969, 0.0
        %v1980 = vadd.f32 %v1978, %v1979
        %v1981 = vld [vmem:[%s9] sm:$0x1]
        %v1983 = vlaneseq
        %v1984 = vshrl.u32 %v1983, 7
        %v1985 = vsub.s32 0, %v1984
        %v1986 = vrot.slane %v1981, %v1985
        %v1988 = vadd.f32 %v1980, %v1986
        %v1989 = vadd.f32 %v725, %v1988
        %v1990 = vsel %vm761, %v1989, 0.0
        %1991 = vadd.xlane.f32.xlu0 %v1990
        %v1992 = vpop.xlane.xlu0 %1991
        %v1993 = vrcp.pop 32.0
        %v1994 = vmul.f32 %v1992, %v1993
        %v1995 = vsub.f32 %v1989, %v1994
        %v1996 = vmul.f32 %v1995, %v1995
        %v1997 = vsel %vm761, %v1996, 0.0
        %1998 = vadd.xlane.f32.xlu0 %v1997
        %v1999 = vpop.xlane.xlu0 %1998
        %v2000 = vmul.f32 %v1999, %v1993
        %v2001 = vadd.f32 %v2000, 1e-05
        %v2002 = vrsqrt.pop %v2001
        %v2003 = vmul.f32 %v1995, %v2002
        %v2004 = vld [vmem:[#allocation10] sm:$0x1]
        %v2006 = vlaneseq
        %v2007 = vshrl.u32 %v2006, 7
        %v2008 = vsub.s32 0, %v2007
        %v2009 = vrot.slane %v2004, %v2008
        %v2011 = vmul.f32 %v2003, %v2009
        %v2012 = vld [vmem:[#allocation11] sm:$0x1]
        %v2014 = vlaneseq
        %v2015 = vshrl.u32 %v2014, 7
        %v2016 = vsub.s32 0, %v2015
        %v2017 = vrot.slane %v2012, %v2016
        %v2019 = vadd.f32 %v2011, %v2017
        %v2020 = vpack.c.bf16 %v2019, %v2019
        %v2021 = vld [vmem:[#allocation13] sm:$0xf]
        %v2022 = vld [vmem:[#allocation13 + $0x4] sm:$0xf]
        %v2023 = vld [vmem:[#allocation13 + $0x8] sm:$0xf]
        %v2024 = vld [vmem:[#allocation13 + $0xc] sm:$0xf]
        %v2025 = vld [vmem:[#allocation14] sm:$0x1]
        %v2027 = vlaneseq
        %v2028 = vshrl.u32 %v2027, 7
        %v2029 = vsub.s32 0, %v2028
        %v2030 = vrot.slane %v2025, %v2029
        %v2036 = vunpack.c.l.b16 %v2021
        %v2037 = vunpack.c.l.b16 %v2022
        %v2038 = vunpack.c.l.b16 %v2023
        %v2039 = vunpack.c.l.b16 %v2024
        %v2040 = vpack.c.b16 %v2037, %v2036
        %v2041 = vpack.c.b16 %v2039, %v2038
        %v2045 = vsel %vm761, %v2020, 0
        %2047 = vmatprep.subr.bf16.mxu0 0
        %2048 = vmatpush1.bf16.msra.mxu0 0
        %2049 = vmatprep.subr.bf16.mxu0 0
        %2050 = vmatpush1.bf16.msra.mxu0 0
        %2051 = vmatprep.subr.bf16.mxu0 0
        %2052 = vmatpush1.bf16.msra.mxu0 0
        %2053 = vmatprep.subr.bf16.mxu0 0
        %2054 = vmatpush1.bf16.msra.mxu0 0
        %2055 = vmatprep.subr.bf16.mxu0 0
        %2056 = vmatpush1.bf16.msra.mxu0 0
        %2057 = vmatprep.subr.bf16.mxu0 0
        %2058 = vmatpush1.bf16.msra.mxu0 0
        %2059 = vmatprep.subr.bf16.mxu0 0
        %2060 = vmatpush1.bf16.msra.mxu0 %v2041
        %2061 = vmatprep.subr.bf16.mxu0 0
        %2062 = vmatpush1.bf16.msra.mxu0 %v2040
        %2063 = vmatprep.subr.bf16.mxu0 0
        %2064 = vmatpush2.bf16.msra.mxu0 0
        %2065 = vmatprep.subr.bf16.mxu0 0
        %2066 = vmatpush2.bf16.msra.mxu0 0
        %2067 = vmatprep.subr.bf16.mxu0 0
        %2068 = vmatpush2.bf16.msra.mxu0 0
        %2069 = vmatprep.subr.bf16.mxu0 0
        %2070 = vmatpush2.bf16.msra.mxu0 0
        %2071 = vmatprep.subr.bf16.mxu0 0
        %2072 = vmatpush2.bf16.msra.mxu0 0
        %2073 = vmatprep.subr.bf16.mxu0 0
        %2074 = vmatpush2.bf16.msra.mxu0 0
        %2075 = vmatprep.subr.bf16.mxu0 0
        %2076 = vmatpush2.bf16.msra.mxu0 0
        %2077 = vmatprep.subr.bf16.mxu0 0
        %2078 = vmatpush2.bf16.msra.mxu0 0
        %2079 = vmatprep.mubr.bf16.mxu0 0
        %2080 = vmatmul.mubr.bf16.gmra.mxu0 %v2045
        %v2081 = vpop.f32.mrf.mxu0
        %v2082 = vadd.f32 %v2030, %v2081
        %v2083 = vpop.f32.mrf.mxu0
        %v2084 = vpop.f32.mrf.mxu0
        %v2085 = vpop.f32.mrf.mxu0
        %2086 = vdwg.mxu0
        %v2087 = vmax.f32 %v2082, 0.0
        %v2088 = vpack.c.bf16 %v2087, %v2087
        %v2089 = vld [vmem:[%s14] sm:$0xf]
        %v2090 = vld [vmem:[%s14 + $0x4] sm:$0xf]
        %v2091 = vld [vmem:[%s14 + $0x8] sm:$0xf]
        %v2092 = vld [vmem:[%s14 + $0xc] sm:$0xf]
        %v2093 = vld [vmem:[%s14 + $0x10] sm:$0xf]
        %v2094 = vld [vmem:[%s14 + $0x14] sm:$0xf]
        %v2095 = vld [vmem:[%s14 + $0x18] sm:$0xf]
        %v2096 = vld [vmem:[%s14 + $0x1c] sm:$0xf]
        %v2097 = vld [vmem:[%s15] sm:$0x1]
        %v2099 = vlaneseq
        %v2100 = vshrl.u32 %v2099, 7
        %v2101 = vsub.s32 0, %v2100
        %v2102 = vrot.slane %v2097, %v2101
        %v2112 = vunpack.c.l.b16 %v2089
        %v2113 = vunpack.c.l.b16 %v2090
        %v2114 = vunpack.c.l.b16 %v2091
        %v2115 = vunpack.c.l.b16 %v2092
        %v2116 = vunpack.c.l.b16 %v2093
        %v2117 = vunpack.c.l.b16 %v2094
        %v2118 = vunpack.c.l.b16 %v2095
        %v2119 = vunpack.c.l.b16 %v2096
        %v2120 = vpack.c.b16 %v2113, %v2112
        %v2121 = vpack.c.b16 %v2115, %v2114
        %v2122 = vpack.c.b16 %v2117, %v2116
        %v2123 = vpack.c.b16 %v2119, %v2118
        %vm2128 = vcmask 523264
        %v2130 = vsel %vm2128, %v2088, 0
        %2132 = vmatprep.subr.bf16.mxu0 0
        %2133 = vmatpush1.bf16.msra.mxu0 0
        %2134 = vmatprep.subr.bf16.mxu0 0
        %2135 = vmatpush1.bf16.msra.mxu0 0
        %2136 = vmatprep.subr.bf16.mxu0 0
        %2137 = vmatpush1.bf16.msra.mxu0 0
        %2138 = vmatprep.subr.bf16.mxu0 0
        %2139 = vmatpush1.bf16.msra.mxu0 0
        %2140 = vmatprep.subr.bf16.mxu0 0
        %2141 = vmatpush1.bf16.msra.mxu0 %v2123
        %2142 = vmatprep.subr.bf16.mxu0 0
        %2143 = vmatpush1.bf16.msra.mxu0 %v2122
        %2144 = vmatprep.subr.bf16.mxu0 0
        %2145 = vmatpush1.bf16.msra.mxu0 %v2121
        %2146 = vmatprep.subr.bf16.mxu0 0
        %2147 = vmatpush1.bf16.msra.mxu0 %v2120
        %2148 = vmatprep.subr.bf16.mxu0 0
        %2149 = vmatpush2.bf16.msra.mxu0 0
        %2150 = vmatprep.subr.bf16.mxu0 0
        %2151 = vmatpush2.bf16.msra.mxu0 0
        %2152 = vmatprep.subr.bf16.mxu0 0
        %2153 = vmatpush2.bf16.msra.mxu0 0
        %2154 = vmatprep.subr.bf16.mxu0 0
        %2155 = vmatpush2.bf16.msra.mxu0 0
        %2156 = vmatprep.subr.bf16.mxu0 0
        %2157 = vmatpush2.bf16.msra.mxu0 0
        %2158 = vmatprep.subr.bf16.mxu0 0
        %2159 = vmatpush2.bf16.msra.mxu0 0
        %2160 = vmatprep.subr.bf16.mxu0 0
        %2161 = vmatpush2.bf16.msra.mxu0 0
        %2162 = vmatprep.subr.bf16.mxu0 0
        %2163 = vmatpush2.bf16.msra.mxu0 0
        %2164 = vmatprep.mubr.bf16.mxu0 0
        %2165 = vmatmul.mubr.bf16.gmra.mxu0 %v2130
        %v2166 = vpop.f32.mrf.mxu0
        %v2167 = vadd.f32 %v2102, %v2166
        %v2168 = vpop.f32.mrf.mxu0
        %v2169 = vpop.f32.mrf.mxu0
        %v2170 = vpop.f32.mrf.mxu0
        %2171 = vdwg.mxu0
        %v2172 = vadd.f32 %v2019, %v2167
        %v2173 = vsel %vm761, %v2172, 0.0
        %2174 = vadd.xlane.f32.xlu0 %v2173
        %v2175 = vpop.xlane.xlu0 %2174
        %v2176 = vmul.f32 %v2175, %v1993
        %v2177 = vsub.f32 %v2172, %v2176
        %v2178 = vmul.f32 %v2177, %v2177
        %v2179 = vsel %vm761, %v2178, 0.0
        %2180 = vadd.xlane.f32.xlu0 %v2179
        %v2181 = vpop.xlane.xlu0 %2180
        %v2182 = vmul.f32 %v2181, %v1993
        %v2183 = vadd.f32 %v2182, 1e-05
        %v2184 = vrsqrt.pop %v2183
        %v2185 = vmul.f32 %v2177, %v2184
        %v2186 = vld [vmem:[%s16] sm:$0x1]
        %v2188 = vlaneseq
        %v2189 = vshrl.u32 %v2188, 7
        %v2190 = vsub.s32 0, %v2189
        %v2191 = vrot.slane %v2186, %v2190
        %v2193 = vmul.f32 %v2185, %v2191
        %v2194 = vld [vmem:[%s17] sm:$0x1]
        %v2196 = vlaneseq
        %v2197 = vshrl.u32 %v2196, 7
        %v2198 = vsub.s32 0, %v2197
        %v2199 = vrot.slane %v2194, %v2198
        %v2201 = vadd.f32 %v2193, %v2199
        %2202 = vst.msk [vmem:[%s712] sm:$0xff] %vm761, %v2201
        %s2203 = sand.u32 %s449, 1
        %s2204 = scalar_lea.sflag [#allocation4], %s2203
        %s2205 = sand.u32 %s449, 1
        %s2206 = smul.addr %s2205, 8
        %s2207 = scalar_lea.vmem [#allocation16], %s2206
        // Predicated region
        $region125: #{tpu_custom_call.1} parent=91 // pred_check
          %p2208 = pneg %p459
        $region126: #{tpu_custom_call.1} parent=91 // pred_check_branch
          %2210 = sbr.rel (%p2208) target = $region128
        $region127: #{tpu_custom_call.1} parent=91 // pred_region
          %s2212 = ssub.s32 128, 128
          %2213 = vsyncadd %s2204, %s2212
          %s2214 = sadd.s32 %s42, %s41
          %s2215 = smul.addr %s2214, 128
          %s2216 = scalar_lea.hbm %s18, %s2215
          %s2218 = sshll.u32 %s2207, 4
          %s2219 = int_to_ptr.vmem [resolvable:$true] %s2218
          %2221 = dma.vmem_to_hbm [thread:$0]  %s2219, 128, %s2216, %s2204
        $region128: #{tpu_custom_call.1} parent=91 // pred_fallthru
          _
      $region92: #{tpu_custom_call.1} parent=5 // pred_fallthru
        _
      %p2222 = scmp.le.s32.totalorder 2, %s32
      // Predicated region
      $region129: #{tpu_custom_call.1} parent=5 // pred_check
        %p2223 = pneg %p2222
      $region130: #{tpu_custom_call.1} parent=5 // pred_check_branch
        %2225 = sbr.rel (%p2223) target = $region132
      $region131: #{tpu_custom_call.1} parent=5 // pred_region
        %s2226 = ssub.s32 %s32, 2
        // Predicated region
        $region133: #{tpu_custom_call.1} parent=131 // pred_check
          %p2227 = pneg %p465
        $region134: #{tpu_custom_call.1} parent=131 // pred_check_branch
          %2229 = sbr.rel (%p2227) target = $region136
        $region135: #{tpu_custom_call.1} parent=131 // pred_region
          %s2230 = sand.u32 %s450, 1
          %s2231 = scalar_lea.sflag [#allocation4], %s2230
          %s2232 = sand.u32 %s450, 1
          %s2233 = smul.addr %s2232, 8
          %s2234 = scalar_lea.vmem [#allocation16], %s2233
          %2235 = dma.done %s2231, 128
        $region136: #{tpu_custom_call.1} parent=131 // pred_fallthru
          _
      $region132: #{tpu_custom_call.1} parent=5 // pred_fallthru
        _
    $region6: #{tpu_custom_call.1} parent=1 // loop_footer
      %s36 = sadd.s32 1, %s32
    $region7: #{tpu_custom_call.1} parent=1 // loop_footer_branch
      %31 = sbr.rel target = $region3
    $region8: #{tpu_custom_call.1} parent=1 // loop_exit
      _
    %2236 = vsyncpa [#allocation3], 1
    %s2237 = scalar_lea.sflag [#allocation3], 1
    %2238 = vsyncpa %s2237, 1
    %2239 = vsyncpa [#allocation6], 1
    %2240 = vsyncpa [#allocation9], 1
    %2241 = vsyncpa [#allocation12], 1
    %2242 = vsyncpa [#allocation15], 1
    %2243 = vsyncpa [#allocation4], 1
    %s2244 = scalar_lea.sflag [#allocation4], 1
    %2245 = vsyncpa %s2244, 1

</llo_original>
